<compile_context>
chip_gen: v7x
topology: tpu7x:2x2x1
jax: 0.10.0
libtpu: 0.0.40
codegen_flags: <defaults>
</compile_context>

<pallas_src>
import functools

import jax
import jax.numpy as jnp
import numpy as np
from jax.experimental import pallas as pl
from jax.experimental.pallas import tpu as pltpu

# ----------------------- synthetic "config" -----------------------
FILTERS = 32              # config.filters
VALUE_FILTERS = 4         # config.value_head_filters
POLICY_FILTERS = 8        # config.policy_head_filters
BOARD_H = 4
BOARD_W = 4
BOARD_SIZE = BOARD_H * BOARD_W      # config.board_size (== H*W, per the .view flatten)
HIDDEN = 256
TOT_ACTIONS = 17          # config.tot_actions
BN_EPS = 1e-5

F_TOT = VALUE_FILTERS + POLICY_FILTERS        # 12 fused conv output channels
F_PAD = 16                                    # padded channel count (lane alignment)
V_FLAT = VALUE_FILTERS * BOARD_SIZE           # 64
P_FLAT = POLICY_FILTERS * BOARD_SIZE          # 128
FLAT_TOT = F_TOT * BOARD_SIZE                 # 192
FLAT_PAD = F_PAD * BOARD_SIZE                 # 256  (full lane tiles)
IN_COLS = FILTERS * BOARD_SIZE                # 512
HID_TOT = 2 * HIDDEN                          # 512
OUT_PAD = 128                                 # lane-dense output slab width


# ----------------------- phase 1: full-batch BN statistics -----------------------
def _stats_kernel(x_ref, wconv_ref, sums_ref):
    """Accumulate per-column [sum(z); sum(z*z)] over the whole (padded) batch.

    Zero-padded batch rows contribute zero, so the sums equal the real-batch sums.
    """
    @pl.when(pl.program_id(0) == 0)
    def _():
        sums_ref[...] = jnp.zeros_like(sums_ref)

    # bf16 x / wconv, f32 accumulation on the MXU
    z = jnp.dot(x_ref[...], wconv_ref[...], preferred_element_type=jnp.float32)  # (T, 256)
    s1 = jnp.sum(z, axis=0, keepdims=True)                                       # (1, 256)
    s2 = jnp.sum(z * z, axis=0, keepdims=True)                                   # (1, 256)
    sums_ref[...] += jnp.concatenate([s1, s2], axis=0)                           # (2, 256)


# ----------------------- phase 2: conv/BN/FC/tanh/softmax apply -----------------------
def _apply_kernel(x_ref, wconv_ref, st_ref, w1_ref, b1_ref, w2_ref, b2_ref, out_ref):
    # Fused 1x1 convs; the channel-major flatten is folded into wconv at pack time.
    z = jnp.dot(x_ref[...], wconv_ref[...], preferred_element_type=jnp.float32)   # (T, 256) f32

    # BatchNorm apply as one scale/shift (s, t precomputed from full-batch stats).
    s = st_ref[0:1, :]                                                            # (1, 256)
    t = st_ref[1:2, :]                                                            # (1, 256)
    a = jnp.maximum(z * s + t, 0.0).astype(jnp.bfloat16)                          # (T, 256)

    # Block-diagonal fused FC stacks (value cols 0:256 / col 0, policy cols 256:512 / 1:18).
    h = jnp.maximum(
        jnp.dot(a, w1_ref[...], preferred_element_type=jnp.float32) + b1_ref[...], 0.0)
    out = jnp.dot(h.astype(jnp.bfloat16), w2_ref[...],
                  preferred_element_type=jnp.float32) + b2_ref[...]               # (T, 128) f32

    # Lane-dense tail: col 0 -> tanh(value), cols 1..17 -> softmax(policy), rest -> 0.
    col = jax.lax.broadcasted_iota(jnp.int32, out.shape, 1)
    is_policy = (col >= 1) & (col < 1 + TOT_ACTIONS)
    logits = jnp.where(is_policy, out, -1e30)           # masked softmax (no lane-offset slices)
    m = jnp.max(logits, axis=1, keepdims=True)
    e = jnp.exp(logits - m)
    p = e * pl.reciprocal(jnp.sum(e, axis=1, keepdims=True), approx=True)
    out_ref[...] = jnp.where(col == 0, jnp.tanh(out), p)


# ----------------------- pallas_call wrapper -----------------------
def _round_up(n, m):
    return ((n + m - 1) // m) * m


def _pinned(shape):
    # weight block pinned to (0, 0): fetched once, VMEM-resident for all grid steps
    return pl.BlockSpec(shape, lambda i: (0,) * len(shape))


def out_block_forward(x, packed, *, tile_n=256):
    """x: (N, FILTERS, H, W) float32 NCHW (as in PyTorch). Returns (p, v).

    BatchNorm uses batch statistics (fresh PyTorch module in train mode),
    computed over the FULL batch regardless of the batch tiling.
    """
    N, C, H, W = x.shape
    HW = H * W
    assert C == FILTERS and HW == BOARD_SIZE

    # Free reshape (NCHW row-major == (N, C*HW)); bf16 halves the dominant HBM stream.
    x_flat = x.reshape(N, C * HW).astype(jnp.bfloat16)

    tile = min(tile_n, _round_up(N, 16))
    n_tiles = pl.cdiv(N, tile)
    n_pad = n_tiles * tile
    if n_pad != N:
        x_flat = jnp.pad(x_flat, ((0, n_pad - N), (0, 0)))   # zero rows: no effect on sums

    vmem_limit = 32 * 1024 * 1024

    # phase 1: full-batch sums (accumulator output, reduction axis -> "arbitrary")
    sums = pl.pallas_call(
        _stats_kernel,
        grid=(n_tiles,),
        in_specs=[pl.BlockSpec((tile, IN_COLS), lambda i: (i, 0)),
                  _pinned((IN_COLS, FLAT_PAD))],
        out_specs=_pinned((2, FLAT_PAD)),
        out_shape=jax.ShapeDtypeStruct((2, FLAT_PAD), jnp.float32),
        compiler_params=pltpu.CompilerParams(dimension_semantics=("arbitrary",),
                                             vmem_limit_bytes=vmem_limit),
    )(x_flat, packed["wconv"])

    # Tiny wrapper-side reduction (192 useful floats): per-channel mean/var -> scale/shift.
    cnt = float(N * HW)
    mean_c = sums[0].reshape(F_PAD, HW).sum(axis=1) / cnt
    ex2_c = sums[1].reshape(F_PAD, HW).sum(axis=1) / cnt
    var_c = jnp.maximum(ex2_c - mean_c * mean_c, 0.0)        # biased var; clamp fp cancellation
    s_c = packed["gamma"] * jax.lax.rsqrt(var_c + BN_EPS)    # padded channels: gamma=0 -> s=0
    t_c = packed["beta"] - mean_c * s_c
    st = jnp.stack([jnp.repeat(s_c, HW), jnp.repeat(t_c, HW)], axis=0).astype(jnp.float32)

    # phase 2: per-tile conv -> BN -> ReLU -> FC1 -> ReLU -> FC2 -> tanh / softmax
    slab = pl.pallas_call(
        _apply_kernel,
        grid=(n_tiles,),
        in_specs=[pl.BlockSpec((tile, IN_COLS), lambda i: (i, 0)),
                  _pinned((IN_COLS, FLAT_PAD)),
                  _pinned((2, FLAT_PAD)),
                  _pinned((FLAT_PAD, HID_TOT)),
                  _pinned((1, HID_TOT)),
                  _pinned((HID_TOT, OUT_PAD)),
                  _pinned((1, OUT_PAD))],
        out_specs=pl.BlockSpec((tile, OUT_PAD), lambda i: (i, 0)),
        out_shape=jax.ShapeDtypeStruct((n_pad, OUT_PAD), jnp.float32),
        compiler_params=pltpu.CompilerParams(dimension_semantics=("parallel",),
                                             vmem_limit_bytes=vmem_limit),
    )(x_flat, packed["wconv"], st, packed["w1"], packed["b1"], packed["w2"], packed["b2"])

    v = slab[:N, 0:1]
    p = slab[:N, 1:1 + TOT_ACTIONS]
    return p, v


# ----------------------- parameter init (PyTorch-style raw params) -----------------------
def init_raw_params(key):
    ks = jax.random.split(key, 16)
    f32 = jnp.float32

    def w(k, shape, scale=0.1):
        return (scale * jax.random.normal(k, shape)).astype(f32)

    return {
        # 1x1 convs, PyTorch layout (C_out, C_in)
        "conv_v_w": w(ks[0], (VALUE_FILTERS, FILTERS)),
        "conv_v_b": w(ks[1], (VALUE_FILTERS,), 0.01),
        "bn_v_gamma": (1.0 + 0.1 * jax.random.normal(ks[2], (VALUE_FILTERS,))).astype(f32),
        "bn_v_beta": w(ks[3], (VALUE_FILTERS,), 0.1),
        "conv_p_w": w(ks[4], (POLICY_FILTERS, FILTERS)),
        "conv_p_b": w(ks[5], (POLICY_FILTERS,), 0.01),
        "bn_p_gamma": (1.0 + 0.1 * jax.random.normal(ks[6], (POLICY_FILTERS,))).astype(f32),
        "bn_p_beta": w(ks[7], (POLICY_FILTERS,), 0.1),
        # Linear layers, PyTorch layout (out, in)
        "fc1_v_w": w(ks[8], (HIDDEN, V_FLAT)),
        "fc1_v_b": w(ks[9], (HIDDEN,), 0.01),
        "fc2_v_w": w(ks[10], (1, HIDDEN)),
        "fc2_v_b": w(ks[11], (1,), 0.01),
        "fc1_p_w": w(ks[12], (HIDDEN, P_FLAT)),
        "fc1_p_b": w(ks[13], (HIDDEN,), 0.01),
        "fc2_p_w": w(ks[14], (TOT_ACTIONS, HIDDEN)),
        "fc2_p_b": w(ks[15], (TOT_ACTIONS,), 0.01),
    }


# ----------------------- one-time weight packing for the fused kernels -----------------------
def pack_params(raw):
    f32, bf16 = jnp.float32, jnp.bfloat16
    HW = BOARD_SIZE
    eye_hw = jnp.eye(HW, dtype=f32)

    # Fused 1x1-conv weight with the channel-major flatten folded in, padded 192 -> 256.
    # Conv biases dropped: batch-statistics BatchNorm cancels them exactly.
    w_all = jnp.concatenate([raw["conv_v_w"], raw["conv_p_w"]], axis=0)           # (12, 32)
    wconv192 = jnp.einsum("cf,hk->chfk", w_all.T, eye_hw).reshape(IN_COLS, FLAT_TOT)
    wconv = jnp.zeros((IN_COLS, FLAT_PAD), f32).at[:, :FLAT_TOT].set(wconv192)

    # Per-channel BN affine params (padded channels get gamma = beta = 0).
    gamma = jnp.zeros((F_PAD,), f32).at[:F_TOT].set(
        jnp.concatenate([raw["bn_v_gamma"], raw["bn_p_gamma"]]))
    beta = jnp.zeros((F_PAD,), f32).at[:F_TOT].set(
        jnp.concatenate([raw["bn_v_beta"], raw["bn_p_beta"]]))

    # Block-diagonal fused FC1 (value cols 0:256, policy cols 256:512); padded rows stay 0.
    w1 = jnp.zeros((FLAT_PAD, HID_TOT), f32)
    w1 = w1.at[:V_FLAT, :HIDDEN].set(raw["fc1_v_w"].T)
    w1 = w1.at[V_FLAT:FLAT_TOT, HIDDEN:].set(raw["fc1_p_w"].T)
    b1 = jnp.concatenate([raw["fc1_v_b"], raw["fc1_p_b"]]).reshape(1, HID_TOT)

    # Fused FC2 packed into a lane-dense 128-wide output slab: col 0 value, cols 1..17 policy.
    w2 = jnp.zeros((HID_TOT, OUT_PAD), f32)
    w2 = w2.at[:HIDDEN, 0:1].set(raw["fc2_v_w"].T)
    w2 = w2.at[HIDDEN:, 1:1 + TOT_ACTIONS].set(raw["fc2_p_w"].T)
    b2 = jnp.zeros((1, OUT_PAD), f32)
    b2 = b2.at[0, 0].set(raw["fc2_v_b"][0])
    b2 = b2.at[0, 1:1 + TOT_ACTIONS].set(raw["fc2_p_b"])

    return {"wconv": wconv.astype(bf16), "gamma": gamma, "beta": beta,
            "w1": w1.astype(bf16), "b1": b1.astype(f32),
            "w2": w2.astype(bf16), "b2": b2.astype(f32)}


# ----------------------- pure-JAX reference (faithful PyTorch semantics, f32) -----------------------
def reference_forward(x, raw):
    N, C, H, W = x.shape
    HW = H * W

    def conv_bn_relu_flat(conv_w, conv_b, gamma, beta, nf):
        y = jnp.einsum("nchw,fc->nfhw", x, conv_w) + conv_b[None, :, None, None]
        mu = y.mean(axis=(0, 2, 3), keepdims=True)
        var = ((y - mu) ** 2).mean(axis=(0, 2, 3), keepdims=True)    # biased batch variance
        yh = (y - mu) / jnp.sqrt(var + BN_EPS)
        a = jnp.maximum(yh * gamma[None, :, None, None] + beta[None, :, None, None], 0.0)
        return a.reshape(N, nf * HW)                                 # channel-major .view

    vf = conv_bn_relu_flat(raw["conv_v_w"], raw["conv_v_b"],
                           raw["bn_v_gamma"], raw["bn_v_beta"], VALUE_FILTERS)
    v = jnp.maximum(vf @ raw["fc1_v_w"].T + raw["fc1_v_b"], 0.0)
    v = jnp.tanh(v @ raw["fc2_v_w"].T + raw["fc2_v_b"])

    pf = conv_bn_relu_flat(raw["conv_p_w"], raw["conv_p_b"],
                           raw["bn_p_gamma"], raw["bn_p_beta"], POLICY_FILTERS)
    hp = jnp.maximum(pf @ raw["fc1_p_w"].T + raw["fc1_p_b"], 0.0)
    logits = hp @ raw["fc2_p_w"].T + raw["fc2_p_b"]
    p = jax.nn.softmax(logits, axis=1)
    return p, v


# ----------------------- main -----------------------
if __name__ == "__main__":
    key = jax.random.PRNGKey(0)
    k_x, k_p = jax.random.split(key)
    N = 40
    x = jax.random.normal(k_x, (N, FILTERS, BOARD_H, BOARD_W), dtype=jnp.float32)

    raw = init_raw_params(k_p)
    packed = pack_params(raw)

    # small tiles (16 rows) so the test exercises multi-tile stats accumulation + pipelining
    fwd = jax.jit(functools.partial(out_block_forward, tile_n=16))
    p, v = jax.block_until_ready(fwd(x, packed))

    p_ref, v_ref = reference_forward(x, raw)
    # bf16 MXU inputs (x, wconv, w1, w2) with f32 accumulation -> compare at ~1e-2 vs f32 ref
    np.testing.assert_allclose(np.asarray(p), np.asarray(p_ref), rtol=1e-2, atol=1e-2)
    np.testing.assert_allclose(np.asarray(v), np.asarray(v_ref), rtol=1e-2, atol=1e-2)
    assert p.shape == (N, TOT_ACTIONS) and v.shape == (N, 1)
    assert np.allclose(np.asarray(p).sum(axis=1), 1.0, atol=5e-3)

    print("KERNEL_OK")
</pallas_src>

<mosaic_0001>
module attributes {stable_mosaic.version = 11 : i64} {
  func.func @_stats_kernel(%arg0: i32, %arg1: memref<16x512xbf16, #tpu.memory_space<vmem>>, %arg2: memref<512x256xbf16, #tpu.memory_space<vmem>>, %arg3: memref<2x256xf32, #tpu.memory_space<vmem>>) attributes {dimension_semantics = [#tpu.dimension_semantics<arbitrary>], iteration_bounds = array<i64: 3>, scalar_prefetch = 0 : i64, scratch_operands = 0 : i64, tpu.core_type = #tpu.core_type<tc>, window_params = [{transform_indices = @transform_0, window_bounds = array<i64: 16, 512>}, {pipeline_mode = #tpu.pipeline_mode<synchronous>, transform_indices = @transform_1, window_bounds = array<i64: 512, 256>}, {pipeline_mode = #tpu.pipeline_mode<synchronous>, transform_indices = @transform_2, window_bounds = array<i64: 2, 256>}]} {
    %c0_i32 = arith.constant 0 : i32
    %0 = arith.cmpi eq, %arg0, %c0_i32 : i32
    %1 = arith.extui %0 : i1 to i32
    %c0_i32_0 = arith.constant 0 : i32
    %2 = arith.cmpi ne, %1, %c0_i32_0 : i32
    scf.if %2 {
      %cst_10 = arith.constant 0.000000e+00 : f32
      %15 = vector.broadcast %cst_10 : f32 to vector<2x256xf32>
      %c0_11 = arith.constant 0 : index
      %c0_12 = arith.constant 0 : index
      %16 = vector.load %arg3[%c0_11, %c0_12] : memref<2x256xf32, #tpu.memory_space<vmem>>, vector<2x256xf32>
      tpu.vector_store %arg3[%c0_11, %c0_12], %15 {strides = array<i32>} : memref<2x256xf32, #tpu.memory_space<vmem>>, vector<2x256xf32>,
    } else {
    }
    %c0 = arith.constant 0 : index
    %c0_1 = arith.constant 0 : index
    %3 = vector.load %arg1[%c0, %c0_1] : memref<16x512xbf16, #tpu.memory_space<vmem>>, vector<16x512xbf16>
    %c0_2 = arith.constant 0 : index
    %c0_3 = arith.constant 0 : index
    %4 = vector.load %arg2[%c0_2, %c0_3] : memref<512x256xbf16, #tpu.memory_space<vmem>>, vector<512x256xbf16>
    %cst = arith.constant dense<0.000000e+00> : vector<16x256xf32>
    %5 = tpu.matmul %3, %4, %cst {dimension_numbers = #tpu.dot_dimension_numbers<[1], [0], [0], [1], [0, 0, 1, 1], [], []>} : vector<16x512xbf16>, vector<512x256xbf16>, vector<16x256xf32> -> vector<16x256xf32>
    %cst_4 = arith.constant dense<0.000000e+00> : vector<256xf32>
    %6 = vector.multi_reduction <add>, %5, %cst_4 [0] : vector<16x256xf32> to vector<256xf32>
    %7 = vector.shape_cast %6 : vector<256xf32> to vector<1x256xf32>
    %8 = arith.mulf %5, %5 : vector<16x256xf32>
    %cst_5 = arith.constant dense<0.000000e+00> : vector<256xf32>
    %9 = vector.multi_reduction <add>, %8, %cst_5 [0] : vector<16x256xf32> to vector<256xf32>
    %10 = vector.shape_cast %9 : vector<256xf32> to vector<1x256xf32>
    %c0_6 = arith.constant 0 : index
    %c0_7 = arith.constant 0 : index
    %11 = vector.load %arg3[%c0_6, %c0_7] : memref<2x256xf32, #tpu.memory_space<vmem>>, vector<2x256xf32>
    %12 = tpu.concatenate %7, %10 in 0 : vector<1x256xf32>, vector<1x256xf32> -> vector<2x256xf32>
    %13 = arith.addf %11, %12 : vector<2x256xf32>
    %c0_8 = arith.constant 0 : index
    %c0_9 = arith.constant 0 : index
    %14 = vector.load %arg3[%c0_8, %c0_9] : memref<2x256xf32, #tpu.memory_space<vmem>>, vector<2x256xf32>
    tpu.vector_store %arg3[%c0_8, %c0_9], %13 {strides = array<i32>} : memref<2x256xf32, #tpu.memory_space<vmem>>, vector<2x256xf32>,
    return
  }
  func.func @transform_0(%arg0: i32) -> (i32, i32) {
    %c0_i32 = arith.constant 0 : i32
    %c0_i32_0 = arith.constant 0 : i32
    return %arg0, %c0_i32 : i32, i32
  }
  func.func @transform_1(%arg0: i32) -> (i32, i32) {
    %c0_i32 = arith.constant 0 : i32
    %c0_i32_0 = arith.constant 0 : i32
    %c0_i32_1 = arith.constant 0 : i32
    return %c0_i32, %c0_i32_0 : i32, i32
  }
  func.func @transform_2(%arg0: i32) -> (i32, i32) {
    %c0_i32 = arith.constant 0 : i32
    %c0_i32_0 = arith.constant 0 : i32
    %c0_i32_1 = arith.constant 0 : i32
    return %c0_i32, %c0_i32_0 : i32, i32
  }
}

module attributes {stable_mosaic.version = 11 : i64} {
  func.func @_apply_kernel(%arg0: i32, %arg1: memref<16x512xbf16, #tpu.memory_space<vmem>>, %arg2: memref<512x256xbf16, #tpu.memory_space<vmem>>, %arg3: memref<2x256xf32, #tpu.memory_space<vmem>>, %arg4: memref<256x512xbf16, #tpu.memory_space<vmem>>, %arg5: memref<1x512xf32, #tpu.memory_space<vmem>>, %arg6: memref<512x128xbf16, #tpu.memory_space<vmem>>, %arg7: memref<1x128xf32, #tpu.memory_space<vmem>>, %arg8: memref<16x128xf32, #tpu.memory_space<vmem>>) attributes {dimension_semantics = [#tpu.dimension_semantics<parallel>], iteration_bounds = array<i64: 3>, scalar_prefetch = 0 : i64, scratch_operands = 0 : i64, tpu.core_type = #tpu.core_type<tc>, window_params = [{transform_indices = @transform_0, window_bounds = array<i64: 16, 512>}, {pipeline_mode = #tpu.pipeline_mode<synchronous>, transform_indices = @transform_1, window_bounds = array<i64: 512, 256>}, {pipeline_mode = #tpu.pipeline_mode<synchronous>, transform_indices = @transform_2, window_bounds = array<i64: 2, 256>}, {pipeline_mode = #tpu.pipeline_mode<synchronous>, transform_indices = @transform_3, window_bounds = array<i64: 256, 512>}, {pipeline_mode = #tpu.pipeline_mode<synchronous>, transform_indices = @transform_4, window_bounds = array<i64: 1, 512>}, {pipeline_mode = #tpu.pipeline_mode<synchronous>, transform_indices = @transform_5, window_bounds = array<i64: 512, 128>}, {pipeline_mode = #tpu.pipeline_mode<synchronous>, transform_indices = @transform_6, window_bounds = array<i64: 1, 128>}, {transform_indices = @transform_7, window_bounds = array<i64: 16, 128>}]} {
    %c0 = arith.constant 0 : index
    %c0_0 = arith.constant 0 : index
    %0 = vector.load %arg1[%c0, %c0_0] : memref<16x512xbf16, #tpu.memory_space<vmem>>, vector<16x512xbf16>
    %c0_1 = arith.constant 0 : index
    %c0_2 = arith.constant 0 : index
    %1 = vector.load %arg2[%c0_1, %c0_2] : memref<512x256xbf16, #tpu.memory_space<vmem>>, vector<512x256xbf16>
    %cst = arith.constant dense<0.000000e+00> : vector<16x256xf32>
    %2 = tpu.matmul %0, %1, %cst {dimension_numbers = #tpu.dot_dimension_numbers<[1], [0], [0], [1], [0, 0, 1, 1], [], []>} : vector<16x512xbf16>, vector<512x256xbf16>, vector<16x256xf32> -> vector<16x256xf32>
    %c0_3 = arith.constant 0 : index
    %c0_4 = arith.constant 0 : index
    %3 = vector.load %arg3[%c0_3, %c0_4] : memref<2x256xf32, #tpu.memory_space<vmem>>, vector<1x256xf32>
    %c1 = arith.constant 1 : index
    %c0_5 = arith.constant 0 : index
    %4 = vector.load %arg3[%c1, %c0_5] : memref<2x256xf32, #tpu.memory_space<vmem>>, vector<1x256xf32>
    %5 = vector.broadcast %3 : vector<1x256xf32> to vector<16x256xf32>
    %6 = arith.mulf %2, %5 : vector<16x256xf32>
    %7 = vector.broadcast %4 : vector<1x256xf32> to vector<16x256xf32>
    %8 = arith.addf %6, %7 : vector<16x256xf32>
    %cst_6 = arith.constant 0.000000e+00 : f32
    %9 = vector.broadcast %cst_6 : f32 to vector<16x256xf32>
    %10 = arith.maximumf %8, %9 : vector<16x256xf32>
    %11 = arith.truncf %10 : vector<16x256xf32> to vector<16x256xbf16>
    %c0_7 = arith.constant 0 : index
    %c0_8 = arith.constant 0 : index
    %12 = vector.load %arg4[%c0_7, %c0_8] : memref<256x512xbf16, #tpu.memory_space<vmem>>, vector<256x512xbf16>
    %cst_9 = arith.constant dense<0.000000e+00> : vector<16x512xf32>
    %13 = tpu.matmul %11, %12, %cst_9 {dimension_numbers = #tpu.dot_dimension_numbers<[1], [0], [0], [1], [0, 0, 1, 1], [], []>} : vector<16x256xbf16>, vector<256x512xbf16>, vector<16x512xf32> -> vector<16x512xf32>
    %c0_10 = arith.constant 0 : index
    %c0_11 = arith.constant 0 : index
    %14 = vector.load %arg5[%c0_10, %c0_11] : memref<1x512xf32, #tpu.memory_space<vmem>>, vector<1x512xf32>
    %15 = vector.broadcast %14 : vector<1x512xf32> to vector<16x512xf32>
    %16 = arith.addf %13, %15 : vector<16x512xf32>
    %cst_12 = arith.constant 0.000000e+00 : f32
    %17 = vector.broadcast %cst_12 : f32 to vector<16x512xf32>
    %18 = arith.maximumf %16, %17 : vector<16x512xf32>
    %19 = arith.truncf %18 : vector<16x512xf32> to vector<16x512xbf16>
    %c0_13 = arith.constant 0 : index
    %c0_14 = arith.constant 0 : index
    %20 = vector.load %arg6[%c0_13, %c0_14] : memref<512x128xbf16, #tpu.memory_space<vmem>>, vector<512x128xbf16>
    %cst_15 = arith.constant dense<0.000000e+00> : vector<16x128xf32>
    %21 = tpu.matmul %19, %20, %cst_15 {dimension_numbers = #tpu.dot_dimension_numbers<[1], [0], [0], [1], [0, 0, 1, 1], [], []>} : vector<16x512xbf16>, vector<512x128xbf16>, vector<16x128xf32> -> vector<16x128xf32>
    %c0_16 = arith.constant 0 : index
    %c0_17 = arith.constant 0 : index
    %22 = vector.load %arg7[%c0_16, %c0_17] : memref<1x128xf32, #tpu.memory_space<vmem>>, vector<1x128xf32>
    %23 = vector.broadcast %22 : vector<1x128xf32> to vector<16x128xf32>
    %24 = arith.addf %21, %23 : vector<16x128xf32>
    %25 = tpu.iota {dimensions = array<i32: 1>} : vector<16x128xi32>
    %c1_i32 = arith.constant 1 : i32
    %26 = vector.broadcast %c1_i32 : i32 to vector<16x128xi32>
    %27 = arith.cmpi sge, %25, %26 : vector<16x128xi32>
    %c18_i32 = arith.constant 18 : i32
    %28 = vector.broadcast %c18_i32 : i32 to vector<16x128xi32>
    %29 = arith.cmpi slt, %25, %28 : vector<16x128xi32>
    %30 = arith.andi %27, %29 : vector<16x128xi1>
    %cst_18 = arith.constant -1.000000e+30 : f32
    %31 = vector.broadcast %cst_18 : f32 to vector<16x128xf32>
    %32 = arith.select %30, %24, %31 : vector<16x128xi1>, vector<16x128xf32>
    %cst_19 = arith.constant dense<0xFF800000> : vector<16xf32>
    %33 = vector.multi_reduction <maximumf>, %32, %cst_19 [1] : vector<16x128xf32> to vector<16xf32>
    %34 = vector.shape_cast %33 : vector<16xf32> to vector<16x1xf32>
    %35 = vector.broadcast %34 : vector<16x1xf32> to vector<16x128xf32>
    %36 = arith.subf %32, %35 : vector<16x128xf32>
    %37 = math.exp %36 : vector<16x128xf32>
    %cst_20 = arith.constant dense<0.000000e+00> : vector<16xf32>
    %38 = vector.multi_reduction <add>, %37, %cst_20 [1] : vector<16x128xf32> to vector<16xf32>
    %39 = vector.shape_cast %38 : vector<16xf32> to vector<16x1xf32>
    %40 = tpu.reciprocal %39 {approx = true} : vector<16x1xf32> -> vector<16x1xf32>
    %41 = vector.broadcast %40 : vector<16x1xf32> to vector<16x128xf32>
    %42 = arith.mulf %37, %41 : vector<16x128xf32>
    %c0_i32 = arith.constant 0 : i32
    %43 = vector.broadcast %c0_i32 : i32 to vector<16x128xi32>
    %44 = arith.cmpi eq, %25, %43 : vector<16x128xi32>
    %45 = math.tanh %24 : vector<16x128xf32>
    %46 = arith.select %44, %45, %42 : vector<16x128xi1>, vector<16x128xf32>
    %c0_21 = arith.constant 0 : index
    %c0_22 = arith.constant 0 : index
    %47 = vector.load %arg8[%c0_21, %c0_22] : memref<16x128xf32, #tpu.memory_space<vmem>>, vector<16x128xf32>
    tpu.vector_store %arg8[%c0_21, %c0_22], %46 {strides = array<i32>} : memref<16x128xf32, #tpu.memory_space<vmem>>, vector<16x128xf32>,
    return
  }
  func.func @transform_0(%arg0: i32) -> (i32, i32) {
    %c0_i32 = arith.constant 0 : i32
    %c0_i32_0 = arith.constant 0 : i32
    return %arg0, %c0_i32 : i32, i32
  }
  func.func @transform_1(%arg0: i32) -> (i32, i32) {
    %c0_i32 = arith.constant 0 : i32
    %c0_i32_0 = arith.constant 0 : i32
    %c0_i32_1 = arith.constant 0 : i32
    return %c0_i32, %c0_i32_0 : i32, i32
  }
  func.func @transform_2(%arg0: i32) -> (i32, i32) {
    %c0_i32 = arith.constant 0 : i32
    %c0_i32_0 = arith.constant 0 : i32
    %c0_i32_1 = arith.constant 0 : i32
    return %c0_i32, %c0_i32_0 : i32, i32
  }
  func.func @transform_3(%arg0: i32) -> (i32, i32) {
    %c0_i32 = arith.constant 0 : i32
    %c0_i32_0 = arith.constant 0 : i32
    %c0_i32_1 = arith.constant 0 : i32
    return %c0_i32, %c0_i32_0 : i32, i32
  }
  func.func @transform_4(%arg0: i32) -> (i32, i32) {
    %c0_i32 = arith.constant 0 : i32
    %c0_i32_0 = arith.constant 0 : i32
    %c0_i32_1 = arith.constant 0 : i32
    return %c0_i32, %c0_i32_0 : i32, i32
  }
  func.func @transform_5(%arg0: i32) -> (i32, i32) {
    %c0_i32 = arith.constant 0 : i32
    %c0_i32_0 = arith.constant 0 : i32
    %c0_i32_1 = arith.constant 0 : i32
    return %c0_i32, %c0_i32_0 : i32, i32
  }
  func.func @transform_6(%arg0: i32) -> (i32, i32) {
    %c0_i32 = arith.constant 0 : i32
    %c0_i32_0 = arith.constant 0 : i32
    %c0_i32_1 = arith.constant 0 : i32
    return %c0_i32, %c0_i32_0 : i32, i32
  }
  func.func @transform_7(%arg0: i32) -> (i32, i32) {
    %c0_i32 = arith.constant 0 : i32
    %c0_i32_0 = arith.constant 0 : i32
    return %arg0, %c0_i32 : i32, i32
  }
}

</mosaic_0001>

<llo_original>
// kernel: squeeze.2
$region0: #{squeeze.2}
  %s0 = inlined_call_operand.vmem [shape: f32[256], index: 0, kind: input, shape index: {}]
  %s1 = inlined_call_operand.vmem [shape: f32[16,16], index: 1, kind: output, shape index: {}]
  $region1: #{squeeze.2} parent=0
    #allocation0 [shape = 'u8[4096]{0}', space=vmem, size = 0x1000, scoped, tag = 'scoped mem for input reshape']
    %s3 = sshllo.u32 0, 2
    %v4 = vld [vmem:[%s0] sm:%s3]
    %5 = vst [vmem:[#allocation0] sm:%s3] %v4
    %v6 = vld [vmem:[#allocation0] sm:$0x3]
    %vm7 = vcmask 130048
    %8 = vst.msk [vmem:[%s1] ss:$8 sm:$0x3] %vm7, %v6
    %v9 = vld [vmem:[#allocation0] sm:$0x3]
    %10 = vrot.lane.b32.xlu0 %v9, 112
    %v11 = vpop.permute.xlu0 %10
    %vm12 = vcmask 130048
    %s13 = scalar_lea.vmem %s1, 1
    %14 = vst.msk [vmem:[%s13] ss:$8 sm:$0x3] %vm12, %v11
    %v15 = vld [vmem:[#allocation0] sm:$0x3]
    %16 = vrot.lane.b32.xlu0 %v15, 96
    %v17 = vpop.permute.xlu0 %16
    %vm18 = vcmask 130048
    %s19 = scalar_lea.vmem %s1, 2
    %20 = vst.msk [vmem:[%s19] ss:$8 sm:$0x3] %vm18, %v17
    %v21 = vld [vmem:[#allocation0] sm:$0x3]
    %22 = vrot.lane.b32.xlu0 %v21, 80
    %v23 = vpop.permute.xlu0 %22
    %vm24 = vcmask 130048
    %s25 = scalar_lea.vmem %s1, 3
    %26 = vst.msk [vmem:[%s25] ss:$8 sm:$0x3] %vm24, %v23
    %v27 = vld [vmem:[#allocation0] sm:$0x3]
    %28 = vrot.lane.b32.xlu0 %v27, 64
    %v29 = vpop.permute.xlu0 %28
    %vm30 = vcmask 130048
    %s31 = scalar_lea.vmem %s1, 4
    %32 = vst.msk [vmem:[%s31] ss:$8 sm:$0x3] %vm30, %v29
    %v33 = vld [vmem:[#allocation0] sm:$0x3]
    %34 = vrot.lane.b32.xlu0 %v33, 48
    %v35 = vpop.permute.xlu0 %34
    %vm36 = vcmask 130048
    %s37 = scalar_lea.vmem %s1, 5
    %38 = vst.msk [vmem:[%s37] ss:$8 sm:$0x3] %vm36, %v35
    %v39 = vld [vmem:[#allocation0] sm:$0x3]
    %40 = vrot.lane.b32.xlu0 %v39, 32
    %v41 = vpop.permute.xlu0 %40
    %vm42 = vcmask 130048
    %s43 = scalar_lea.vmem %s1, 6
    %44 = vst.msk [vmem:[%s43] ss:$8 sm:$0x3] %vm42, %v41
    %v45 = vld [vmem:[#allocation0] sm:$0x3]
    %46 = vrot.lane.b32.xlu0 %v45, 16
    %v47 = vpop.permute.xlu0 %46
    %vm48 = vcmask 130048
    %s49 = scalar_lea.vmem %s1, 7
    %50 = vst.msk [vmem:[%s49] ss:$8 sm:$0x3] %vm48, %v47

// kernel: out_block_forward.2
$region0: #{out_block_forward.2}
  #allocation0 [shape = 'u32[]', space=smem, size = 0x4, offset = 0x4, fixed_abs, tag = 'smem constant byte address 0x4 - core index']
  #allocation1 [shape = 'u32[144,128]{1,0:T(1,128)}', space=vmem, size = 0x12000, scoped, tag = 'internal scratch']
  %s0 = inlined_call_operand.vmem [shape: bf16[48,512], index: 0, kind: input, shape index: {}]
  %s1 = inlined_call_operand.vmem [shape: bf16[512,256], index: 1, kind: input, shape index: {}]
  %s2 = inlined_call_operand.vmem [shape: f32[2,256], index: 2, kind: output, shape index: {}]
  %s3 = sld [smem:[#allocation0]]
  $region45: #{out_block_forward.2} parent=0
    _
  %s5 = ssub.s32 1, %s3
  %s6 = scalar_select 0, %s5, %s3
  loop: start=0, step=1, limit=5
  $region2: #{out_block_forward.2} parent=0 // loop_pre_header
    _
  $region3: #{out_block_forward.2} parent=0 // loop_header
    %s8 = sphi 0, %s12
    %p9 = scmp.ge.s32.totalorder %s8, 5
    %s18 = sphi 0, %s20
    %s21 = sphi 0, %s18
    %s22 = sphi 0, %s21
    %s38 = sphi 0, %s22
    %s42 = sphi 0, %s42
    %s44 = sphi 0, %s42
    %s45 = sphi 0, %s44
    %s59 = sphi 0, %s45
    %s63 = sphi 0, %s63
    %s65 = sphi 0, %s63
    %s66 = sphi 0, %s65
    %s80 = sphi 0, %s66
  $region4: #{out_block_forward.2} parent=0 // loop_header_branch
    %11 = sbr.rel (%p9) target = $region8
  $region5: #{out_block_forward.2} parent=0 // loop_body
    %s13 = ssub.s32 %s8, 1
    %s14 = ssub.s32 %s8, 2
    %s15 = sadd.s32 %s8, 1
    %s16 = ssub.s32 %s8, %s15
    %p17 = scmp.eq.s32.totalorder %s16, 0
    %s19 = sadd.s32 %s18, 1
    %s20 = scalar_select %p17, %s18, %s19
    %p23 = pneg %p17
    %p24 = scmp.eq.s32.totalorder %s8, 2
    %p25 = por %p23, %p24
    %p26 = scmp.ne.s32.totalorder %s18, %s21
    %p27 = scmp.eq.s32.totalorder %s8, 0
    %p28 = por %p26, %p27
    %p29 = scmp.ne.s32.totalorder %s18, %s21
    %p30 = scmp.eq.s32.totalorder %s13, 2
    %p31 = por %p29, %p30
    %p32 = scmp.ne.s32.totalorder %s21, %s22
    %p33 = scmp.eq.s32.totalorder %s13, 0
    %p34 = por %p32, %p33
    %p35 = scmp.ne.s32.totalorder %s21, %s22
    %p36 = scmp.eq.s32.totalorder %s14, 2
    %p37 = por %p35, %p36
    %p39 = scmp.ne.s32.totalorder %s22, %s38
    %p40 = scmp.eq.s32.totalorder %s14, 0
    %p41 = por %p39, %p40
    %s43 = sadd.s32 %s42, 1
    %p46 = scmp.eq.s32.totalorder %s8, 2
    %p47 = scmp.ne.s32.totalorder %s42, %s44
    %p48 = scmp.eq.s32.totalorder %s8, 0
    %p49 = por %p47, %p48
    %p50 = scmp.ne.s32.totalorder %s42, %s44
    %p51 = scmp.eq.s32.totalorder %s13, 2
    %p52 = por %p50, %p51
    %p53 = scmp.ne.s32.totalorder %s44, %s45
    %p54 = scmp.eq.s32.totalorder %s13, 0
    %p55 = por %p53, %p54
    %p56 = scmp.ne.s32.totalorder %s44, %s45
    %p57 = scmp.eq.s32.totalorder %s14, 2
    %p58 = por %p56, %p57
    %p60 = scmp.ne.s32.totalorder %s45, %s59
    %p61 = scmp.eq.s32.totalorder %s14, 0
    %p62 = por %p60, %p61
    %s64 = sadd.s32 %s63, 1
    %p67 = scmp.eq.s32.totalorder %s8, 2
    %p68 = scmp.ne.s32.totalorder %s63, %s65
    %p69 = scmp.eq.s32.totalorder %s8, 0
    %p70 = por %p68, %p69
    %p71 = scmp.ne.s32.totalorder %s63, %s65
    %p72 = scmp.eq.s32.totalorder %s13, 2
    %p73 = por %p71, %p72
    %p74 = scmp.ne.s32.totalorder %s65, %s66
    %p75 = scmp.eq.s32.totalorder %s13, 0
    %p76 = por %p74, %p75
    %p77 = scmp.ne.s32.totalorder %s65, %s66
    %p78 = scmp.eq.s32.totalorder %s14, 2
    %p79 = por %p77, %p78
    %p81 = scmp.ne.s32.totalorder %s66, %s80
    %p82 = scmp.eq.s32.totalorder %s14, 0
    %p83 = por %p81, %p82
    %p84 = scmp.le.s32.totalorder 1, %s8
    %p85 = scmp.lt.s32.totalorder %s8, 4
    %p86 = pnand %p84, %p85
    %p87 = pneg %p86
    // Predicated region
    $region9: #{out_block_forward.2} parent=5 // pred_check
      _
    $region10: #{out_block_forward.2} parent=5 // pred_check_branch
      %89 = sbr.rel (%p86) target = $region12
    $region11: #{out_block_forward.2} parent=5 // pred_region
      %s90 = ssub.s32 %s8, 1
      // Predicated region
      $region13: #{out_block_forward.2} parent=11 // pred_check
        %p91 = pneg %p55
      $region14: #{out_block_forward.2} parent=11 // pred_check_branch
        %93 = sbr.rel (%p91) target = $region16
      $region15: #{out_block_forward.2} parent=11 // pred_region
        _
      $region16: #{out_block_forward.2} parent=11 // pred_fallthru
        _
    $region12: #{out_block_forward.2} parent=5 // pred_fallthru
      _
    %p94 = scmp.lt.s32.totalorder %s8, 3
    // Predicated region
    $region17: #{out_block_forward.2} parent=5 // pred_check
      %p95 = pneg %p94
    $region18: #{out_block_forward.2} parent=5 // pred_check_branch
      %97 = sbr.rel (%p95) target = $region20
    $region19: #{out_block_forward.2} parent=5 // pred_region
      // Predicated region
      $region21: #{out_block_forward.2} parent=19 // pred_check
        %p98 = pneg %p28
      $region22: #{out_block_forward.2} parent=19 // pred_check_branch
        %100 = sbr.rel (%p98) target = $region24
      $region23: #{out_block_forward.2} parent=19 // pred_region
        %s101 = smul.u32 2, %s8
        %p102 = scmp.lt.s32.totalorder %s101, 5
        %s103 = scalar_select %p102, %s101, 5
        %s104 = smul.addr %s103, 4
        %s105 = smul.addr %s104, 4
        %s106 = scalar_lea.vmem %s0, %s105
        %s107 = smul.u32 2, %s8
      $region24: #{out_block_forward.2} parent=19 // pred_fallthru
        _
    $region20: #{out_block_forward.2} parent=5 // pred_fallthru
      _
    %p108 = scmp.le.s32.totalorder 1, %s8
    %p109 = scmp.lt.s32.totalorder %s8, 4
    %p110 = pnand %p108, %p109
    %p111 = pneg %p110
    // Predicated region
    $region25: #{out_block_forward.2} parent=5 // pred_check
      _
    $region26: #{out_block_forward.2} parent=5 // pred_check_branch
      %113 = sbr.rel (%p110) target = $region28
    $region27: #{out_block_forward.2} parent=5 // pred_region
      %s114 = ssub.s32 %s8, 1
      %s115 = smul.u32 2, %s13
      %p116 = scmp.lt.s32.totalorder %s115, 5
      %s117 = scalar_select %p116, %s115, 5
      %s118 = smul.addr %s117, 4
      %s119 = smul.addr %s118, 4
      %s120 = scalar_lea.vmem %s0, %s119
      %p121 = pneg %p34
      %p122 = pneg %p31
      %p123 = pneg %p55
      %p124 = pneg %p52
      %p125 = pneg %p76
      %p126 = pneg %p73
      %s127 = smul.u32 2, %s13
      %p128 = scmp.lt.s32.totalorder %s127, 5
      %s129 = scalar_select %p128, %s127, 5
      %s130 = smul.addr %s129, 4
      %s131 = smul.addr %s130, 4
      %s132 = scalar_lea.vmem %s0, %s131
      %s133 = smul.u32 2, %s13
      %p134 = scmp.eq.s32.totalorder %s13, 0
      // Predicated region
      $region29: #{out_block_forward.2} parent=27 // pred_check
        %p135 = pneg %p134
      $region30: #{out_block_forward.2} parent=27 // pred_check_branch
        %137 = sbr.rel (%p135) target = $region32
      $region31: #{out_block_forward.2} parent=27 // pred_region
        %138 = vst [vmem:[%s2] sm:$0xf] 0.0
      $region32: #{out_block_forward.2} parent=27 // pred_fallthru
        _
      %v139 = vld [vmem:[%s132] sm:$0xff]
      %v140 = vld [vmem:[%s132 + $0x8] sm:$0xff]
      %v141 = vld [vmem:[%s132 + $0x10] sm:$0xff]
      %v142 = vld [vmem:[%s132 + $0x18] sm:$0xff]
      %v143 = vld [vmem:[%s1] sm:$0xff]
      %v144 = vld [vmem:[%s1 + $0x8] sm:$0xff]
      %v145 = vld [vmem:[%s1 + $0x10] sm:$0xff]
      %v146 = vld [vmem:[%s1 + $0x18] sm:$0xff]
      %v147 = vld [vmem:[%s1 + $0x20] sm:$0xff]
      %v148 = vld [vmem:[%s1 + $0x28] sm:$0xff]
      %v149 = vld [vmem:[%s1 + $0x30] sm:$0xff]
      %v150 = vld [vmem:[%s1 + $0x38] sm:$0xff]
      %v151 = vld [vmem:[%s1 + $0x40] sm:$0xff]
      %v152 = vld [vmem:[%s1 + $0x48] sm:$0xff]
      %v153 = vld [vmem:[%s1 + $0x50] sm:$0xff]
      %v154 = vld [vmem:[%s1 + $0x58] sm:$0xff]
      %v155 = vld [vmem:[%s1 + $0x60] sm:$0xff]
      %v156 = vld [vmem:[%s1 + $0x68] sm:$0xff]
      %v157 = vld [vmem:[%s1 + $0x70] sm:$0xff]
      %v158 = vld [vmem:[%s1 + $0x78] sm:$0xff]
      %v159 = vld [vmem:[%s1 + $0x80] sm:$0xff]
      %v160 = vld [vmem:[%s1 + $0x88] sm:$0xff]
      %v161 = vld [vmem:[%s1 + $0x90] sm:$0xff]
      %v162 = vld [vmem:[%s1 + $0x98] sm:$0xff]
      %v163 = vld [vmem:[%s1 + $0xa0] sm:$0xff]
      %v164 = vld [vmem:[%s1 + $0xa8] sm:$0xff]
      %v165 = vld [vmem:[%s1 + $0xb0] sm:$0xff]
      %v166 = vld [vmem:[%s1 + $0xb8] sm:$0xff]
      %v167 = vld [vmem:[%s1 + $0xc0] sm:$0xff]
      %v168 = vld [vmem:[%s1 + $0xc8] sm:$0xff]
      %v169 = vld [vmem:[%s1 + $0xd0] sm:$0xff]
      %v170 = vld [vmem:[%s1 + $0xd8] sm:$0xff]
      %v171 = vld [vmem:[%s1 + $0xe0] sm:$0xff]
      %v172 = vld [vmem:[%s1 + $0xe8] sm:$0xff]
      %v173 = vld [vmem:[%s1 + $0xf0] sm:$0xff]
      %v174 = vld [vmem:[%s1 + $0xf8] sm:$0xff]
      %v175 = vld [vmem:[%s1 + $0x100] sm:$0xff]
      %v176 = vld [vmem:[%s1 + $0x108] sm:$0xff]
      %v177 = vld [vmem:[%s1 + $0x110] sm:$0xff]
      %v178 = vld [vmem:[%s1 + $0x118] sm:$0xff]
      %v179 = vld [vmem:[%s1 + $0x120] sm:$0xff]
      %v180 = vld [vmem:[%s1 + $0x128] sm:$0xff]
      %v181 = vld [vmem:[%s1 + $0x130] sm:$0xff]
      %v182 = vld [vmem:[%s1 + $0x138] sm:$0xff]
      %v183 = vld [vmem:[%s1 + $0x140] sm:$0xff]
      %v184 = vld [vmem:[%s1 + $0x148] sm:$0xff]
      %v185 = vld [vmem:[%s1 + $0x150] sm:$0xff]
      %v186 = vld [vmem:[%s1 + $0x158] sm:$0xff]
      %v187 = vld [vmem:[%s1 + $0x160] sm:$0xff]
      %v188 = vld [vmem:[%s1 + $0x168] sm:$0xff]
      %v189 = vld [vmem:[%s1 + $0x170] sm:$0xff]
      %v190 = vld [vmem:[%s1 + $0x178] sm:$0xff]
      %v191 = vld [vmem:[%s1 + $0x180] sm:$0xff]
      %v192 = vld [vmem:[%s1 + $0x188] sm:$0xff]
      %v193 = vld [vmem:[%s1 + $0x190] sm:$0xff]
      %v194 = vld [vmem:[%s1 + $0x198] sm:$0xff]
      %v195 = vld [vmem:[%s1 + $0x1a0] sm:$0xff]
      %v196 = vld [vmem:[%s1 + $0x1a8] sm:$0xff]
      %v197 = vld [vmem:[%s1 + $0x1b0] sm:$0xff]
      %v198 = vld [vmem:[%s1 + $0x1b8] sm:$0xff]
      %v199 = vld [vmem:[%s1 + $0x1c0] sm:$0xff]
      %v200 = vld [vmem:[%s1 + $0x1c8] sm:$0xff]
      %v201 = vld [vmem:[%s1 + $0x1d0] sm:$0xff]
      %v202 = vld [vmem:[%s1 + $0x1d8] sm:$0xff]
      %v203 = vld [vmem:[%s1 + $0x1e0] sm:$0xff]
      %v204 = vld [vmem:[%s1 + $0x1e8] sm:$0xff]
      %v205 = vld [vmem:[%s1 + $0x1f0] sm:$0xff]
      %v206 = vld [vmem:[%s1 + $0x1f8] sm:$0xff]
      %v211 = vunpack.c.l.b16 %v139
      %v212 = vunpack.c.h.b16 %v139
      %v213 = vunpack.c.l.b16 %v140
      %v214 = vunpack.c.h.b16 %v140
      %v215 = vunpack.c.l.b16 %v141
      %v216 = vunpack.c.h.b16 %v141
      %v217 = vunpack.c.l.b16 %v142
      %v218 = vunpack.c.h.b16 %v142
      %v219 = vpack.c.b16 %v215, %v211
      %v220 = vpack.c.b16 %v216, %v212
      %v221 = vpack.c.b16 %v217, %v213
      %v222 = vpack.c.b16 %v218, %v214
      %v291 = vunpack.c.l.b16 %v143
      %v292 = vunpack.c.h.b16 %v143
      %v293 = vunpack.c.l.b16 %v144
      %v294 = vunpack.c.h.b16 %v144
      %v295 = vunpack.c.l.b16 %v145
      %v296 = vunpack.c.h.b16 %v145
      %v297 = vunpack.c.l.b16 %v146
      %v298 = vunpack.c.h.b16 %v146
      %v299 = vunpack.c.l.b16 %v147
      %v300 = vunpack.c.h.b16 %v147
      %v301 = vunpack.c.l.b16 %v148
      %v302 = vunpack.c.h.b16 %v148
      %v303 = vunpack.c.l.b16 %v149
      %v304 = vunpack.c.h.b16 %v149
      %v305 = vunpack.c.l.b16 %v150
      %v306 = vunpack.c.h.b16 %v150
      %v307 = vunpack.c.l.b16 %v151
      %v308 = vunpack.c.h.b16 %v151
      %v309 = vunpack.c.l.b16 %v152
      %v310 = vunpack.c.h.b16 %v152
      %v311 = vunpack.c.l.b16 %v153
      %v312 = vunpack.c.h.b16 %v153
      %v313 = vunpack.c.l.b16 %v154
      %v314 = vunpack.c.h.b16 %v154
      %v315 = vunpack.c.l.b16 %v155
      %v316 = vunpack.c.h.b16 %v155
      %v317 = vunpack.c.l.b16 %v156
      %v318 = vunpack.c.h.b16 %v156
      %v319 = vunpack.c.l.b16 %v157
      %v320 = vunpack.c.h.b16 %v157
      %v321 = vunpack.c.l.b16 %v158
      %v322 = vunpack.c.h.b16 %v158
      %v323 = vunpack.c.l.b16 %v159
      %v324 = vunpack.c.h.b16 %v159
      %v325 = vunpack.c.l.b16 %v160
      %v326 = vunpack.c.h.b16 %v160
      %v327 = vunpack.c.l.b16 %v161
      %v328 = vunpack.c.h.b16 %v161
      %v329 = vunpack.c.l.b16 %v162
      %v330 = vunpack.c.h.b16 %v162
      %v331 = vunpack.c.l.b16 %v163
      %v332 = vunpack.c.h.b16 %v163
      %v333 = vunpack.c.l.b16 %v164
      %v334 = vunpack.c.h.b16 %v164
      %v335 = vunpack.c.l.b16 %v165
      %v336 = vunpack.c.h.b16 %v165
      %v337 = vunpack.c.l.b16 %v166
      %v338 = vunpack.c.h.b16 %v166
      %v339 = vunpack.c.l.b16 %v167
      %v340 = vunpack.c.h.b16 %v167
      %v341 = vunpack.c.l.b16 %v168
      %v342 = vunpack.c.h.b16 %v168
      %v343 = vunpack.c.l.b16 %v169
      %v344 = vunpack.c.h.b16 %v169
      %v345 = vunpack.c.l.b16 %v170
      %v346 = vunpack.c.h.b16 %v170
      %v347 = vunpack.c.l.b16 %v171
      %v348 = vunpack.c.h.b16 %v171
      %v349 = vunpack.c.l.b16 %v172
      %v350 = vunpack.c.h.b16 %v172
      %v351 = vunpack.c.l.b16 %v173
      %v352 = vunpack.c.h.b16 %v173
      %v353 = vunpack.c.l.b16 %v174
      %v354 = vunpack.c.h.b16 %v174
      %v355 = vunpack.c.l.b16 %v175
      %v356 = vunpack.c.h.b16 %v175
      %v357 = vunpack.c.l.b16 %v176
      %v358 = vunpack.c.h.b16 %v176
      %v359 = vunpack.c.l.b16 %v177
      %v360 = vunpack.c.h.b16 %v177
      %v361 = vunpack.c.l.b16 %v178
      %v362 = vunpack.c.h.b16 %v178
      %v363 = vunpack.c.l.b16 %v179
      %v364 = vunpack.c.h.b16 %v179
      %v365 = vunpack.c.l.b16 %v180
      %v366 = vunpack.c.h.b16 %v180
      %v367 = vunpack.c.l.b16 %v181
      %v368 = vunpack.c.h.b16 %v181
      %v369 = vunpack.c.l.b16 %v182
      %v370 = vunpack.c.h.b16 %v182
      %v371 = vunpack.c.l.b16 %v183
      %v372 = vunpack.c.h.b16 %v183
      %v373 = vunpack.c.l.b16 %v184
      %v374 = vunpack.c.h.b16 %v184
      %v375 = vunpack.c.l.b16 %v185
      %v376 = vunpack.c.h.b16 %v185
      %v377 = vunpack.c.l.b16 %v186
      %v378 = vunpack.c.h.b16 %v186
      %v379 = vunpack.c.l.b16 %v187
      %v380 = vunpack.c.h.b16 %v187
      %v381 = vunpack.c.l.b16 %v188
      %v382 = vunpack.c.h.b16 %v188
      %v383 = vunpack.c.l.b16 %v189
      %v384 = vunpack.c.h.b16 %v189
      %v385 = vunpack.c.l.b16 %v190
      %v386 = vunpack.c.h.b16 %v190
      %v387 = vunpack.c.l.b16 %v191
      %v388 = vunpack.c.h.b16 %v191
      %v389 = vunpack.c.l.b16 %v192
      %v390 = vunpack.c.h.b16 %v192
      %v391 = vunpack.c.l.b16 %v193
      %v392 = vunpack.c.h.b16 %v193
      %v393 = vunpack.c.l.b16 %v194
      %v394 = vunpack.c.h.b16 %v194
      %v395 = vunpack.c.l.b16 %v195
      %v396 = vunpack.c.h.b16 %v195
      %v397 = vunpack.c.l.b16 %v196
      %v398 = vunpack.c.h.b16 %v196
      %v399 = vunpack.c.l.b16 %v197
      %v400 = vunpack.c.h.b16 %v197
      %v401 = vunpack.c.l.b16 %v198
      %v402 = vunpack.c.h.b16 %v198
      %v403 = vunpack.c.l.b16 %v199
      %v404 = vunpack.c.h.b16 %v199
      %v405 = vunpack.c.l.b16 %v200
      %v406 = vunpack.c.h.b16 %v200
      %v407 = vunpack.c.l.b16 %v201
      %v408 = vunpack.c.h.b16 %v201
      %v409 = vunpack.c.l.b16 %v202
      %v410 = vunpack.c.h.b16 %v202
      %v411 = vunpack.c.l.b16 %v203
      %v412 = vunpack.c.h.b16 %v203
      %v413 = vunpack.c.l.b16 %v204
      %v414 = vunpack.c.h.b16 %v204
      %v415 = vunpack.c.l.b16 %v205
      %v416 = vunpack.c.h.b16 %v205
      %v417 = vunpack.c.l.b16 %v206
      %v418 = vunpack.c.h.b16 %v206
      %v419 = vpack.c.b16 %v293, %v291
      %v420 = vpack.c.b16 %v294, %v292
      %v421 = vpack.c.b16 %v297, %v295
      %v422 = vpack.c.b16 %v298, %v296
      %v423 = vpack.c.b16 %v301, %v299
      %v424 = vpack.c.b16 %v302, %v300
      %v425 = vpack.c.b16 %v305, %v303
      %v426 = vpack.c.b16 %v306, %v304
      %v427 = vpack.c.b16 %v309, %v307
      %v428 = vpack.c.b16 %v310, %v308
      %v429 = vpack.c.b16 %v313, %v311
      %v430 = vpack.c.b16 %v314, %v312
      %v431 = vpack.c.b16 %v317, %v315
      %v432 = vpack.c.b16 %v318, %v316
      %v433 = vpack.c.b16 %v321, %v319
      %v434 = vpack.c.b16 %v322, %v320
      %v435 = vpack.c.b16 %v325, %v323
      %v436 = vpack.c.b16 %v326, %v324
      %v437 = vpack.c.b16 %v329, %v327
      %v438 = vpack.c.b16 %v330, %v328
      %v439 = vpack.c.b16 %v333, %v331
      %v440 = vpack.c.b16 %v334, %v332
      %v441 = vpack.c.b16 %v337, %v335
      %v442 = vpack.c.b16 %v338, %v336
      %v443 = vpack.c.b16 %v341, %v339
      %v444 = vpack.c.b16 %v342, %v340
      %v445 = vpack.c.b16 %v345, %v343
      %v446 = vpack.c.b16 %v346, %v344
      %v447 = vpack.c.b16 %v349, %v347
      %v448 = vpack.c.b16 %v350, %v348
      %v449 = vpack.c.b16 %v353, %v351
      %v450 = vpack.c.b16 %v354, %v352
      %v451 = vpack.c.b16 %v357, %v355
      %v452 = vpack.c.b16 %v358, %v356
      %v453 = vpack.c.b16 %v361, %v359
      %v454 = vpack.c.b16 %v362, %v360
      %v455 = vpack.c.b16 %v365, %v363
      %v456 = vpack.c.b16 %v366, %v364
      %v457 = vpack.c.b16 %v369, %v367
      %v458 = vpack.c.b16 %v370, %v368
      %v459 = vpack.c.b16 %v373, %v371
      %v460 = vpack.c.b16 %v374, %v372
      %v461 = vpack.c.b16 %v377, %v375
      %v462 = vpack.c.b16 %v378, %v376
      %v463 = vpack.c.b16 %v381, %v379
      %v464 = vpack.c.b16 %v382, %v380
      %v465 = vpack.c.b16 %v385, %v383
      %v466 = vpack.c.b16 %v386, %v384
      %v467 = vpack.c.b16 %v389, %v387
      %v468 = vpack.c.b16 %v390, %v388
      %v469 = vpack.c.b16 %v393, %v391
      %v470 = vpack.c.b16 %v394, %v392
      %v471 = vpack.c.b16 %v397, %v395
      %v472 = vpack.c.b16 %v398, %v396
      %v473 = vpack.c.b16 %v401, %v399
      %v474 = vpack.c.b16 %v402, %v400
      %v475 = vpack.c.b16 %v405, %v403
      %v476 = vpack.c.b16 %v406, %v404
      %v477 = vpack.c.b16 %v409, %v407
      %v478 = vpack.c.b16 %v410, %v408
      %v479 = vpack.c.b16 %v413, %v411
      %v480 = vpack.c.b16 %v414, %v412
      %v481 = vpack.c.b16 %v417, %v415
      %v482 = vpack.c.b16 %v418, %v416
      %547 = vmatprep.subr.bf16.mxu0 %v420
      %548 = vmatpush1.bf16.msra.mxu0 %v419
      %549 = vmatprep.subr.bf16.mxu0 %v422
      %550 = vmatpush1.bf16.msra.mxu0 %v421
      %551 = vmatprep.subr.bf16.mxu0 %v424
      %552 = vmatpush1.bf16.msra.mxu0 %v423
      %553 = vmatprep.subr.bf16.mxu0 %v426
      %554 = vmatpush1.bf16.msra.mxu0 %v425
      %555 = vmatprep.subr.bf16.mxu0 %v428
      %556 = vmatpush1.bf16.msra.mxu0 %v427
      %557 = vmatprep.subr.bf16.mxu0 %v430
      %558 = vmatpush1.bf16.msra.mxu0 %v429
      %559 = vmatprep.subr.bf16.mxu0 %v432
      %560 = vmatpush1.bf16.msra.mxu0 %v431
      %561 = vmatprep.subr.bf16.mxu0 %v434
      %562 = vmatpush1.bf16.msra.mxu0 %v433
      %563 = vmatprep.subr.bf16.mxu0 %v436
      %564 = vmatpush1.bf16.msra.mxu0 %v435
      %565 = vmatprep.subr.bf16.mxu0 %v438
      %566 = vmatpush1.bf16.msra.mxu0 %v437
      %567 = vmatprep.subr.bf16.mxu0 %v440
      %568 = vmatpush1.bf16.msra.mxu0 %v439
      %569 = vmatprep.subr.bf16.mxu0 %v442
      %570 = vmatpush1.bf16.msra.mxu0 %v441
      %571 = vmatprep.subr.bf16.mxu0 %v444
      %572 = vmatpush1.bf16.msra.mxu0 %v443
      %573 = vmatprep.subr.bf16.mxu0 %v446
      %574 = vmatpush1.bf16.msra.mxu0 %v445
      %575 = vmatprep.subr.bf16.mxu0 %v448
      %576 = vmatpush1.bf16.msra.mxu0 %v447
      %577 = vmatprep.subr.bf16.mxu0 %v450
      %578 = vmatpush1.bf16.msra.mxu0 %v449
      %579 = vmatprep.mubr.bf16.mxu0 %v220
      %580 = vmatmul.mubr.bf16.gmra.mrb[0].mxu0 %v219
      %v581 = vpop.f32.mrb[0].mxu0
      %v582 = vadd.f32 0.0, %v581
      %v583 = vpop.f32.mrb[0].mxu0
      %v584 = vadd.f32 0.0, %v583
      %v585 = vpop.f32.mrb[0].mxu0
      %v586 = vadd.f32 0.0, %v585
      %v587 = vpop.f32.mrb[0].mxu0
      %v588 = vadd.f32 0.0, %v587
      %589 = vdwg.mxu0
      %590 = vmatprep.subr.bf16.mxu0 %v452
      %591 = vmatpush1.bf16.msra.mxu0 %v451
      %592 = vmatprep.subr.bf16.mxu0 %v454
      %593 = vmatpush1.bf16.msra.mxu0 %v453
      %594 = vmatprep.subr.bf16.mxu0 %v456
      %595 = vmatpush1.bf16.msra.mxu0 %v455
      %596 = vmatprep.subr.bf16.mxu0 %v458
      %597 = vmatpush1.bf16.msra.mxu0 %v457
      %598 = vmatprep.subr.bf16.mxu0 %v460
      %599 = vmatpush1.bf16.msra.mxu0 %v459
      %600 = vmatprep.subr.bf16.mxu0 %v462
      %601 = vmatpush1.bf16.msra.mxu0 %v461
      %602 = vmatprep.subr.bf16.mxu0 %v464
      %603 = vmatpush1.bf16.msra.mxu0 %v463
      %604 = vmatprep.subr.bf16.mxu0 %v466
      %605 = vmatpush1.bf16.msra.mxu0 %v465
      %606 = vmatprep.subr.bf16.mxu0 %v468
      %607 = vmatpush1.bf16.msra.mxu0 %v467
      %608 = vmatprep.subr.bf16.mxu0 %v470
      %609 = vmatpush1.bf16.msra.mxu0 %v469
      %610 = vmatprep.subr.bf16.mxu0 %v472
      %611 = vmatpush1.bf16.msra.mxu0 %v471
      %612 = vmatprep.subr.bf16.mxu0 %v474
      %613 = vmatpush1.bf16.msra.mxu0 %v473
      %614 = vmatprep.subr.bf16.mxu0 %v476
      %615 = vmatpush1.bf16.msra.mxu0 %v475
      %616 = vmatprep.subr.bf16.mxu0 %v478
      %617 = vmatpush1.bf16.msra.mxu0 %v477
      %618 = vmatprep.subr.bf16.mxu0 %v480
      %619 = vmatpush1.bf16.msra.mxu0 %v479
      %620 = vmatprep.subr.bf16.mxu0 %v482
      %621 = vmatpush1.bf16.msra.mxu0 %v481
      %622 = vmatprep.mubr.bf16.mxu0 %v222
      %623 = vmatmul.mubr.bf16.gmra.mrb[0].mxu0 %v221
      %v624 = vpop.f32.mrb[0].mxu0
      %v625 = vadd.f32 %v582, %v624
      %v626 = vpop.f32.mrb[0].mxu0
      %v627 = vadd.f32 %v584, %v626
      %v628 = vpop.f32.mrb[0].mxu0
      %v629 = vadd.f32 %v586, %v628
      %v630 = vpop.f32.mrb[0].mxu0
      %v631 = vadd.f32 %v588, %v630
      %632 = vdwg.mxu0
      %v633 = vadd.f32 %v625, %v629
      %v634 = vrot.slane %v633, 4
      %v635 = vadd.f32 %v633, %v634
      %v636 = vrot.slane %v635, 2
      %v637 = vadd.f32 %v635, %v636
      %v638 = vrot.slane %v637, 1
      %v639 = vadd.f32 %v637, %v638
      %v640 = vadd.f32 %v627, %v631
      %v641 = vrot.slane %v640, 4
      %v642 = vadd.f32 %v640, %v641
      %v643 = vrot.slane %v642, 2
      %v644 = vadd.f32 %v642, %v643
      %v645 = vrot.slane %v644, 1
      %v646 = vadd.f32 %v644, %v645
      %v647 = vmul.f32 %v625, %v625
      %v648 = vmul.f32 %v627, %v627
      %v649 = vmul.f32 %v629, %v629
      %v650 = vmul.f32 %v631, %v631
      %v651 = vadd.f32 %v647, %v649
      %v652 = vrot.slane %v651, 4
      %v653 = vadd.f32 %v651, %v652
      %v654 = vrot.slane %v653, 2
      %v655 = vadd.f32 %v653, %v654
      %v656 = vrot.slane %v655, 1
      %v657 = vadd.f32 %v655, %v656
      %v658 = vadd.f32 %v648, %v650
      %v659 = vrot.slane %v658, 4
      %v660 = vadd.f32 %v658, %v659
      %v661 = vrot.slane %v660, 2
      %v662 = vadd.f32 %v660, %v661
      %v663 = vrot.slane %v662, 1
      %v664 = vadd.f32 %v662, %v663
      %v665 = vld [vmem:[%s2] sm:$0xf]
      %vm666 = vcmask 1040384
      %v667 = vsel %vm666, %v639, %v657
      %v668 = vsel %vm666, %v646, %v664
      %v671 = vcombine.low %v667, %v668
      %v673 = vunpack.c.l.s4 1983009808
      %v674 = vunpack.c.0.s8 %v673
      %v675 = vlaneseq
      %v676 = vshrl.u32 %v675, 7
      %v677 = vsub.s32 %v674, %v676
      %v678 = vrot.slane %v671, %v677
      %v680 = vadd.f32 %v665, %v678
      %681 = vst [vmem:[%s2] sm:$0xf] %v680
      // Predicated region
      $region33: #{out_block_forward.2} parent=27 // pred_check
        %p682 = pneg %p73
      $region34: #{out_block_forward.2} parent=27 // pred_check_branch
        %684 = sbr.rel (%p682) target = $region36
      $region35: #{out_block_forward.2} parent=27 // pred_region
        _
      $region36: #{out_block_forward.2} parent=27 // pred_fallthru
        _
      // Predicated region
      $region37: #{out_block_forward.2} parent=27 // pred_check
        %p685 = pneg %p73
      $region38: #{out_block_forward.2} parent=27 // pred_check_branch
        %687 = sbr.rel (%p685) target = $region40
      $region39: #{out_block_forward.2} parent=27 // pred_region
        _
      $region40: #{out_block_forward.2} parent=27 // pred_fallthru
        _
    $region28: #{out_block_forward.2} parent=5 // pred_fallthru
      _
    %p688 = scmp.le.s32.totalorder 2, %s8
    // Predicated region
    $region41: #{out_block_forward.2} parent=5 // pred_check
      %p689 = pneg %p688
    $region42: #{out_block_forward.2} parent=5 // pred_check_branch
      %691 = sbr.rel (%p689) target = $region44
    $region43: #{out_block_forward.2} parent=5 // pred_region
      %s692 = ssub.s32 %s8, 2
    $region44: #{out_block_forward.2} parent=5 // pred_fallthru
      _
  $region6: #{out_block_forward.2} parent=0 // loop_footer
    %s12 = sadd.s32 1, %s8
  $region7: #{out_block_forward.2} parent=0 // loop_footer_branch
    %7 = sbr.rel target = $region3
  $region8: #{out_block_forward.2} parent=0 // loop_exit
    _

// kernel: out_block_forward.3
$region0: #{out_block_forward.3}
  #allocation0 [shape = 'u32[]', space=smem, size = 0x4, offset = 0x4, fixed_abs, tag = 'smem constant byte address 0x4 - core index']
  #allocation1 [shape = 'u32[144,128]{1,0:T(1,128)}', space=vmem, size = 0x12000, scoped, tag = 'internal scratch']
  %s0 = inlined_call_operand.vmem [shape: bf16[48,512], index: 0, kind: input, shape index: {}]
  %s1 = inlined_call_operand.vmem [shape: bf16[512,256], index: 1, kind: input, shape index: {}]
  %s2 = inlined_call_operand.vmem [shape: f32[2,256], index: 2, kind: input, shape index: {}]
  %s3 = inlined_call_operand.vmem [shape: bf16[256,512], index: 3, kind: input, shape index: {}]
  %s4 = inlined_call_operand.vmem [shape: f32[1,512], index: 4, kind: input, shape index: {}]
  %s5 = inlined_call_operand.vmem [shape: bf16[512,128], index: 5, kind: input, shape index: {}]
  %s6 = inlined_call_operand.vmem [shape: f32[1,128], index: 6, kind: input, shape index: {}]
  %s7 = inlined_call_operand.vmem [shape: f32[48,128], index: 7, kind: output, shape index: {}]
  %s8 = sld [smem:[#allocation0]]
  $region61: #{out_block_forward.3} parent=0
    _
  %s10 = ssub.s32 1, %s8
  %s11 = scalar_select 0, %s10, %s8
  loop: start=0, step=1, limit=5
  $region2: #{out_block_forward.3} parent=0 // loop_pre_header
    _
  $region3: #{out_block_forward.3} parent=0 // loop_header
    %s13 = sphi 0, %s17
    %p14 = scmp.ge.s32.totalorder %s13, 5
    %s23 = sphi 0, %s25
    %s26 = sphi 0, %s23
    %s27 = sphi 0, %s26
    %s43 = sphi 0, %s27
    %s47 = sphi 0, %s47
    %s49 = sphi 0, %s47
    %s50 = sphi 0, %s49
    %s64 = sphi 0, %s50
    %s68 = sphi 0, %s68
    %s70 = sphi 0, %s68
    %s71 = sphi 0, %s70
    %s85 = sphi 0, %s71
    %s89 = sphi 0, %s89
    %s91 = sphi 0, %s89
    %s92 = sphi 0, %s91
    %s106 = sphi 0, %s92
    %s110 = sphi 0, %s110
    %s112 = sphi 0, %s110
    %s113 = sphi 0, %s112
    %s127 = sphi 0, %s113
    %s131 = sphi 0, %s131
    %s133 = sphi 0, %s131
    %s134 = sphi 0, %s133
    %s148 = sphi 0, %s134
    %s152 = sphi 0, %s152
    %s154 = sphi 0, %s152
    %s155 = sphi 0, %s154
    %s169 = sphi 0, %s155
    %s175 = sphi 0, %s177
    %s178 = sphi 0, %s175
    %s179 = sphi 0, %s178
    %s195 = sphi 0, %s179
  $region4: #{out_block_forward.3} parent=0 // loop_header_branch
    %16 = sbr.rel (%p14) target = $region8
  $region5: #{out_block_forward.3} parent=0 // loop_body
    %s18 = ssub.s32 %s13, 1
    %s19 = ssub.s32 %s13, 2
    %s20 = sadd.s32 %s13, 1
    %s21 = ssub.s32 %s13, %s20
    %p22 = scmp.eq.s32.totalorder %s21, 0
    %s24 = sadd.s32 %s23, 1
    %s25 = scalar_select %p22, %s23, %s24
    %p28 = pneg %p22
    %p29 = scmp.eq.s32.totalorder %s13, 2
    %p30 = por %p28, %p29
    %p31 = scmp.ne.s32.totalorder %s23, %s26
    %p32 = scmp.eq.s32.totalorder %s13, 0
    %p33 = por %p31, %p32
    %p34 = scmp.ne.s32.totalorder %s23, %s26
    %p35 = scmp.eq.s32.totalorder %s18, 2
    %p36 = por %p34, %p35
    %p37 = scmp.ne.s32.totalorder %s26, %s27
    %p38 = scmp.eq.s32.totalorder %s18, 0
    %p39 = por %p37, %p38
    %p40 = scmp.ne.s32.totalorder %s26, %s27
    %p41 = scmp.eq.s32.totalorder %s19, 2
    %p42 = por %p40, %p41
    %p44 = scmp.ne.s32.totalorder %s27, %s43
    %p45 = scmp.eq.s32.totalorder %s19, 0
    %p46 = por %p44, %p45
    %s48 = sadd.s32 %s47, 1
    %p51 = scmp.eq.s32.totalorder %s13, 2
    %p52 = scmp.ne.s32.totalorder %s47, %s49
    %p53 = scmp.eq.s32.totalorder %s13, 0
    %p54 = por %p52, %p53
    %p55 = scmp.ne.s32.totalorder %s47, %s49
    %p56 = scmp.eq.s32.totalorder %s18, 2
    %p57 = por %p55, %p56
    %p58 = scmp.ne.s32.totalorder %s49, %s50
    %p59 = scmp.eq.s32.totalorder %s18, 0
    %p60 = por %p58, %p59
    %p61 = scmp.ne.s32.totalorder %s49, %s50
    %p62 = scmp.eq.s32.totalorder %s19, 2
    %p63 = por %p61, %p62
    %p65 = scmp.ne.s32.totalorder %s50, %s64
    %p66 = scmp.eq.s32.totalorder %s19, 0
    %p67 = por %p65, %p66
    %s69 = sadd.s32 %s68, 1
    %p72 = scmp.eq.s32.totalorder %s13, 2
    %p73 = scmp.ne.s32.totalorder %s68, %s70
    %p74 = scmp.eq.s32.totalorder %s13, 0
    %p75 = por %p73, %p74
    %p76 = scmp.ne.s32.totalorder %s68, %s70
    %p77 = scmp.eq.s32.totalorder %s18, 2
    %p78 = por %p76, %p77
    %p79 = scmp.ne.s32.totalorder %s70, %s71
    %p80 = scmp.eq.s32.totalorder %s18, 0
    %p81 = por %p79, %p80
    %p82 = scmp.ne.s32.totalorder %s70, %s71
    %p83 = scmp.eq.s32.totalorder %s19, 2
    %p84 = por %p82, %p83
    %p86 = scmp.ne.s32.totalorder %s71, %s85
    %p87 = scmp.eq.s32.totalorder %s19, 0
    %p88 = por %p86, %p87
    %s90 = sadd.s32 %s89, 1
    %p93 = scmp.eq.s32.totalorder %s13, 2
    %p94 = scmp.ne.s32.totalorder %s89, %s91
    %p95 = scmp.eq.s32.totalorder %s13, 0
    %p96 = por %p94, %p95
    %p97 = scmp.ne.s32.totalorder %s89, %s91
    %p98 = scmp.eq.s32.totalorder %s18, 2
    %p99 = por %p97, %p98
    %p100 = scmp.ne.s32.totalorder %s91, %s92
    %p101 = scmp.eq.s32.totalorder %s18, 0
    %p102 = por %p100, %p101
    %p103 = scmp.ne.s32.totalorder %s91, %s92
    %p104 = scmp.eq.s32.totalorder %s19, 2
    %p105 = por %p103, %p104
    %p107 = scmp.ne.s32.totalorder %s92, %s106
    %p108 = scmp.eq.s32.totalorder %s19, 0
    %p109 = por %p107, %p108
    %s111 = sadd.s32 %s110, 1
    %p114 = scmp.eq.s32.totalorder %s13, 2
    %p115 = scmp.ne.s32.totalorder %s110, %s112
    %p116 = scmp.eq.s32.totalorder %s13, 0
    %p117 = por %p115, %p116
    %p118 = scmp.ne.s32.totalorder %s110, %s112
    %p119 = scmp.eq.s32.totalorder %s18, 2
    %p120 = por %p118, %p119
    %p121 = scmp.ne.s32.totalorder %s112, %s113
    %p122 = scmp.eq.s32.totalorder %s18, 0
    %p123 = por %p121, %p122
    %p124 = scmp.ne.s32.totalorder %s112, %s113
    %p125 = scmp.eq.s32.totalorder %s19, 2
    %p126 = por %p124, %p125
    %p128 = scmp.ne.s32.totalorder %s113, %s127
    %p129 = scmp.eq.s32.totalorder %s19, 0
    %p130 = por %p128, %p129
    %s132 = sadd.s32 %s131, 1
    %p135 = scmp.eq.s32.totalorder %s13, 2
    %p136 = scmp.ne.s32.totalorder %s131, %s133
    %p137 = scmp.eq.s32.totalorder %s13, 0
    %p138 = por %p136, %p137
    %p139 = scmp.ne.s32.totalorder %s131, %s133
    %p140 = scmp.eq.s32.totalorder %s18, 2
    %p141 = por %p139, %p140
    %p142 = scmp.ne.s32.totalorder %s133, %s134
    %p143 = scmp.eq.s32.totalorder %s18, 0
    %p144 = por %p142, %p143
    %p145 = scmp.ne.s32.totalorder %s133, %s134
    %p146 = scmp.eq.s32.totalorder %s19, 2
    %p147 = por %p145, %p146
    %p149 = scmp.ne.s32.totalorder %s134, %s148
    %p150 = scmp.eq.s32.totalorder %s19, 0
    %p151 = por %p149, %p150
    %s153 = sadd.s32 %s152, 1
    %p156 = scmp.eq.s32.totalorder %s13, 2
    %p157 = scmp.ne.s32.totalorder %s152, %s154
    %p158 = scmp.eq.s32.totalorder %s13, 0
    %p159 = por %p157, %p158
    %p160 = scmp.ne.s32.totalorder %s152, %s154
    %p161 = scmp.eq.s32.totalorder %s18, 2
    %p162 = por %p160, %p161
    %p163 = scmp.ne.s32.totalorder %s154, %s155
    %p164 = scmp.eq.s32.totalorder %s18, 0
    %p165 = por %p163, %p164
    %p166 = scmp.ne.s32.totalorder %s154, %s155
    %p167 = scmp.eq.s32.totalorder %s19, 2
    %p168 = por %p166, %p167
    %p170 = scmp.ne.s32.totalorder %s155, %s169
    %p171 = scmp.eq.s32.totalorder %s19, 0
    %p172 = por %p170, %p171
    %s173 = ssub.s32 %s13, %s20
    %p174 = scmp.eq.s32.totalorder %s173, 0
    %s176 = sadd.s32 %s175, 1
    %s177 = scalar_select %p174, %s175, %s176
    %p180 = pneg %p174
    %p181 = scmp.eq.s32.totalorder %s13, 2
    %p182 = por %p180, %p181
    %p183 = scmp.ne.s32.totalorder %s175, %s178
    %p184 = scmp.eq.s32.totalorder %s13, 0
    %p185 = por %p183, %p184
    %p186 = scmp.ne.s32.totalorder %s175, %s178
    %p187 = scmp.eq.s32.totalorder %s18, 2
    %p188 = por %p186, %p187
    %p189 = scmp.ne.s32.totalorder %s178, %s179
    %p190 = scmp.eq.s32.totalorder %s18, 0
    %p191 = por %p189, %p190
    %p192 = scmp.ne.s32.totalorder %s178, %s179
    %p193 = scmp.eq.s32.totalorder %s19, 2
    %p194 = por %p192, %p193
    %p196 = scmp.ne.s32.totalorder %s179, %s195
    %p197 = scmp.eq.s32.totalorder %s19, 0
    %p198 = por %p196, %p197
    %p199 = scmp.le.s32.totalorder 1, %s13
    %p200 = scmp.lt.s32.totalorder %s13, 4
    %p201 = pnand %p199, %p200
    %p202 = pneg %p201
    // Predicated region
    $region9: #{out_block_forward.3} parent=5 // pred_check
      _
    $region10: #{out_block_forward.3} parent=5 // pred_check_branch
      %204 = sbr.rel (%p201) target = $region12
    $region11: #{out_block_forward.3} parent=5 // pred_region
      %s205 = ssub.s32 %s13, 1
      // Predicated region
      $region13: #{out_block_forward.3} parent=11 // pred_check
        %p206 = pneg %p60
      $region14: #{out_block_forward.3} parent=11 // pred_check_branch
        %208 = sbr.rel (%p206) target = $region16
      $region15: #{out_block_forward.3} parent=11 // pred_region
        _
      $region16: #{out_block_forward.3} parent=11 // pred_fallthru
        _
      // Predicated region
      $region17: #{out_block_forward.3} parent=11 // pred_check
        %p209 = pneg %p81
      $region18: #{out_block_forward.3} parent=11 // pred_check_branch
        %211 = sbr.rel (%p209) target = $region20
      $region19: #{out_block_forward.3} parent=11 // pred_region
        _
      $region20: #{out_block_forward.3} parent=11 // pred_fallthru
        _
      // Predicated region
      $region21: #{out_block_forward.3} parent=11 // pred_check
        %p212 = pneg %p102
      $region22: #{out_block_forward.3} parent=11 // pred_check_branch
        %214 = sbr.rel (%p212) target = $region24
      $region23: #{out_block_forward.3} parent=11 // pred_region
        _
      $region24: #{out_block_forward.3} parent=11 // pred_fallthru
        _
      // Predicated region
      $region25: #{out_block_forward.3} parent=11 // pred_check
        %p215 = pneg %p123
      $region26: #{out_block_forward.3} parent=11 // pred_check_branch
        %217 = sbr.rel (%p215) target = $region28
      $region27: #{out_block_forward.3} parent=11 // pred_region
        _
      $region28: #{out_block_forward.3} parent=11 // pred_fallthru
        _
      // Predicated region
      $region29: #{out_block_forward.3} parent=11 // pred_check
        %p218 = pneg %p144
      $region30: #{out_block_forward.3} parent=11 // pred_check_branch
        %220 = sbr.rel (%p218) target = $region32
      $region31: #{out_block_forward.3} parent=11 // pred_region
        _
      $region32: #{out_block_forward.3} parent=11 // pred_fallthru
        _
      // Predicated region
      $region33: #{out_block_forward.3} parent=11 // pred_check
        %p221 = pneg %p165
      $region34: #{out_block_forward.3} parent=11 // pred_check_branch
        %223 = sbr.rel (%p221) target = $region36
      $region35: #{out_block_forward.3} parent=11 // pred_region
        _
      $region36: #{out_block_forward.3} parent=11 // pred_fallthru
        _
    $region12: #{out_block_forward.3} parent=5 // pred_fallthru
      _
    %p224 = scmp.lt.s32.totalorder %s13, 3
    // Predicated region
    $region37: #{out_block_forward.3} parent=5 // pred_check
      %p225 = pneg %p224
    $region38: #{out_block_forward.3} parent=5 // pred_check_branch
      %227 = sbr.rel (%p225) target = $region40
    $region39: #{out_block_forward.3} parent=5 // pred_region
      // Predicated region
      $region41: #{out_block_forward.3} parent=39 // pred_check
        %p228 = pneg %p33
      $region42: #{out_block_forward.3} parent=39 // pred_check_branch
        %230 = sbr.rel (%p228) target = $region44
      $region43: #{out_block_forward.3} parent=39 // pred_region
        %s231 = smul.u32 2, %s13
        %p232 = scmp.lt.s32.totalorder %s231, 5
        %s233 = scalar_select %p232, %s231, 5
        %s234 = smul.addr %s233, 4
        %s235 = smul.addr %s234, 4
        %s236 = scalar_lea.vmem %s0, %s235
        %s237 = smul.u32 2, %s13
      $region44: #{out_block_forward.3} parent=39 // pred_fallthru
        _
    $region40: #{out_block_forward.3} parent=5 // pred_fallthru
      _
    %p238 = scmp.le.s32.totalorder 1, %s13
    %p239 = scmp.lt.s32.totalorder %s13, 4
    %p240 = pnand %p238, %p239
    %p241 = pneg %p240
    // Predicated region
    $region45: #{out_block_forward.3} parent=5 // pred_check
      _
    $region46: #{out_block_forward.3} parent=5 // pred_check_branch
      %243 = sbr.rel (%p240) target = $region48
    $region47: #{out_block_forward.3} parent=5 // pred_region
      %s244 = ssub.s32 %s13, 1
      %s245 = smul.u32 2, %s18
      %p246 = scmp.lt.s32.totalorder %s245, 5
      %s247 = scalar_select %p246, %s245, 5
      %s248 = smul.addr %s247, 4
      %s249 = smul.addr %s248, 4
      %s250 = scalar_lea.vmem %s0, %s249
      %p251 = pneg %p39
      %p252 = pneg %p36
      %p253 = pneg %p60
      %p254 = pneg %p57
      %p255 = pneg %p81
      %p256 = pneg %p78
      %p257 = pneg %p102
      %p258 = pneg %p99
      %p259 = pneg %p123
      %p260 = pneg %p120
      %p261 = pneg %p144
      %p262 = pneg %p141
      %p263 = pneg %p165
      %p264 = pneg %p162
      %p265 = pneg %p191
      %p266 = pneg %p188
      %s267 = smul.u32 2, %s18
      %p268 = scmp.lt.s32.totalorder %s267, 5
      %s269 = scalar_select %p268, %s267, 5
      %s270 = smul.addr %s269, 8
      %s271 = scalar_lea.vmem %s7, %s270
      %s272 = smul.u32 2, %s18
      %p273 = scmp.lt.s32.totalorder %s272, 5
      %s274 = scalar_select %p273, %s272, 5
      %s275 = smul.addr %s274, 4
      %s276 = smul.addr %s275, 4
      %s277 = scalar_lea.vmem %s0, %s276
      %s278 = smul.u32 2, %s18
      %s279 = smul.u32 2, %s18
      %p280 = scmp.lt.s32.totalorder %s279, 5
      %s281 = scalar_select %p280, %s279, 5
      %s282 = smul.addr %s281, 8
      %s283 = scalar_lea.vmem %s7, %s282
      %s284 = smul.u32 2, %s18
      %v286 = vld [vmem:[%s277] sm:$0xff]
      %v287 = vld [vmem:[%s277 + $0x8] sm:$0xff]
      %v288 = vld [vmem:[%s277 + $0x10] sm:$0xff]
      %v289 = vld [vmem:[%s277 + $0x18] sm:$0xff]
      %v290 = vld [vmem:[%s1] sm:$0xff]
      %v291 = vld [vmem:[%s1 + $0x8] sm:$0xff]
      %v292 = vld [vmem:[%s1 + $0x10] sm:$0xff]
      %v293 = vld [vmem:[%s1 + $0x18] sm:$0xff]
      %v294 = vld [vmem:[%s1 + $0x20] sm:$0xff]
      %v295 = vld [vmem:[%s1 + $0x28] sm:$0xff]
      %v296 = vld [vmem:[%s1 + $0x30] sm:$0xff]
      %v297 = vld [vmem:[%s1 + $0x38] sm:$0xff]
      %v298 = vld [vmem:[%s1 + $0x40] sm:$0xff]
      %v299 = vld [vmem:[%s1 + $0x48] sm:$0xff]
      %v300 = vld [vmem:[%s1 + $0x50] sm:$0xff]
      %v301 = vld [vmem:[%s1 + $0x58] sm:$0xff]
      %v302 = vld [vmem:[%s1 + $0x60] sm:$0xff]
      %v303 = vld [vmem:[%s1 + $0x68] sm:$0xff]
      %v304 = vld [vmem:[%s1 + $0x70] sm:$0xff]
      %v305 = vld [vmem:[%s1 + $0x78] sm:$0xff]
      %v306 = vld [vmem:[%s1 + $0x80] sm:$0xff]
      %v307 = vld [vmem:[%s1 + $0x88] sm:$0xff]
      %v308 = vld [vmem:[%s1 + $0x90] sm:$0xff]
      %v309 = vld [vmem:[%s1 + $0x98] sm:$0xff]
      %v310 = vld [vmem:[%s1 + $0xa0] sm:$0xff]
      %v311 = vld [vmem:[%s1 + $0xa8] sm:$0xff]
      %v312 = vld [vmem:[%s1 + $0xb0] sm:$0xff]
      %v313 = vld [vmem:[%s1 + $0xb8] sm:$0xff]
      %v314 = vld [vmem:[%s1 + $0xc0] sm:$0xff]
      %v315 = vld [vmem:[%s1 + $0xc8] sm:$0xff]
      %v316 = vld [vmem:[%s1 + $0xd0] sm:$0xff]
      %v317 = vld [vmem:[%s1 + $0xd8] sm:$0xff]
      %v318 = vld [vmem:[%s1 + $0xe0] sm:$0xff]
      %v319 = vld [vmem:[%s1 + $0xe8] sm:$0xff]
      %v320 = vld [vmem:[%s1 + $0xf0] sm:$0xff]
      %v321 = vld [vmem:[%s1 + $0xf8] sm:$0xff]
      %v322 = vld [vmem:[%s1 + $0x100] sm:$0xff]
      %v323 = vld [vmem:[%s1 + $0x108] sm:$0xff]
      %v324 = vld [vmem:[%s1 + $0x110] sm:$0xff]
      %v325 = vld [vmem:[%s1 + $0x118] sm:$0xff]
      %v326 = vld [vmem:[%s1 + $0x120] sm:$0xff]
      %v327 = vld [vmem:[%s1 + $0x128] sm:$0xff]
      %v328 = vld [vmem:[%s1 + $0x130] sm:$0xff]
      %v329 = vld [vmem:[%s1 + $0x138] sm:$0xff]
      %v330 = vld [vmem:[%s1 + $0x140] sm:$0xff]
      %v331 = vld [vmem:[%s1 + $0x148] sm:$0xff]
      %v332 = vld [vmem:[%s1 + $0x150] sm:$0xff]
      %v333 = vld [vmem:[%s1 + $0x158] sm:$0xff]
      %v334 = vld [vmem:[%s1 + $0x160] sm:$0xff]
      %v335 = vld [vmem:[%s1 + $0x168] sm:$0xff]
      %v336 = vld [vmem:[%s1 + $0x170] sm:$0xff]
      %v337 = vld [vmem:[%s1 + $0x178] sm:$0xff]
      %v338 = vld [vmem:[%s1 + $0x180] sm:$0xff]
      %v339 = vld [vmem:[%s1 + $0x188] sm:$0xff]
      %v340 = vld [vmem:[%s1 + $0x190] sm:$0xff]
      %v341 = vld [vmem:[%s1 + $0x198] sm:$0xff]
      %v342 = vld [vmem:[%s1 + $0x1a0] sm:$0xff]
      %v343 = vld [vmem:[%s1 + $0x1a8] sm:$0xff]
      %v344 = vld [vmem:[%s1 + $0x1b0] sm:$0xff]
      %v345 = vld [vmem:[%s1 + $0x1b8] sm:$0xff]
      %v346 = vld [vmem:[%s1 + $0x1c0] sm:$0xff]
      %v347 = vld [vmem:[%s1 + $0x1c8] sm:$0xff]
      %v348 = vld [vmem:[%s1 + $0x1d0] sm:$0xff]
      %v349 = vld [vmem:[%s1 + $0x1d8] sm:$0xff]
      %v350 = vld [vmem:[%s1 + $0x1e0] sm:$0xff]
      %v351 = vld [vmem:[%s1 + $0x1e8] sm:$0xff]
      %v352 = vld [vmem:[%s1 + $0x1f0] sm:$0xff]
      %v353 = vld [vmem:[%s1 + $0x1f8] sm:$0xff]
      %v358 = vunpack.c.l.b16 %v286
      %v359 = vunpack.c.h.b16 %v286
      %v360 = vunpack.c.l.b16 %v287
      %v361 = vunpack.c.h.b16 %v287
      %v362 = vunpack.c.l.b16 %v288
      %v363 = vunpack.c.h.b16 %v288
      %v364 = vunpack.c.l.b16 %v289
      %v365 = vunpack.c.h.b16 %v289
      %v366 = vpack.c.b16 %v362, %v358
      %v367 = vpack.c.b16 %v363, %v359
      %v368 = vpack.c.b16 %v364, %v360
      %v369 = vpack.c.b16 %v365, %v361
      %v438 = vunpack.c.l.b16 %v290
      %v439 = vunpack.c.h.b16 %v290
      %v440 = vunpack.c.l.b16 %v291
      %v441 = vunpack.c.h.b16 %v291
      %v442 = vunpack.c.l.b16 %v292
      %v443 = vunpack.c.h.b16 %v292
      %v444 = vunpack.c.l.b16 %v293
      %v445 = vunpack.c.h.b16 %v293
      %v446 = vunpack.c.l.b16 %v294
      %v447 = vunpack.c.h.b16 %v294
      %v448 = vunpack.c.l.b16 %v295
      %v449 = vunpack.c.h.b16 %v295
      %v450 = vunpack.c.l.b16 %v296
      %v451 = vunpack.c.h.b16 %v296
      %v452 = vunpack.c.l.b16 %v297
      %v453 = vunpack.c.h.b16 %v297
      %v454 = vunpack.c.l.b16 %v298
      %v455 = vunpack.c.h.b16 %v298
      %v456 = vunpack.c.l.b16 %v299
      %v457 = vunpack.c.h.b16 %v299
      %v458 = vunpack.c.l.b16 %v300
      %v459 = vunpack.c.h.b16 %v300
      %v460 = vunpack.c.l.b16 %v301
      %v461 = vunpack.c.h.b16 %v301
      %v462 = vunpack.c.l.b16 %v302
      %v463 = vunpack.c.h.b16 %v302
      %v464 = vunpack.c.l.b16 %v303
      %v465 = vunpack.c.h.b16 %v303
      %v466 = vunpack.c.l.b16 %v304
      %v467 = vunpack.c.h.b16 %v304
      %v468 = vunpack.c.l.b16 %v305
      %v469 = vunpack.c.h.b16 %v305
      %v470 = vunpack.c.l.b16 %v306
      %v471 = vunpack.c.h.b16 %v306
      %v472 = vunpack.c.l.b16 %v307
      %v473 = vunpack.c.h.b16 %v307
      %v474 = vunpack.c.l.b16 %v308
      %v475 = vunpack.c.h.b16 %v308
      %v476 = vunpack.c.l.b16 %v309
      %v477 = vunpack.c.h.b16 %v309
      %v478 = vunpack.c.l.b16 %v310
      %v479 = vunpack.c.h.b16 %v310
      %v480 = vunpack.c.l.b16 %v311
      %v481 = vunpack.c.h.b16 %v311
      %v482 = vunpack.c.l.b16 %v312
      %v483 = vunpack.c.h.b16 %v312
      %v484 = vunpack.c.l.b16 %v313
      %v485 = vunpack.c.h.b16 %v313
      %v486 = vunpack.c.l.b16 %v314
      %v487 = vunpack.c.h.b16 %v314
      %v488 = vunpack.c.l.b16 %v315
      %v489 = vunpack.c.h.b16 %v315
      %v490 = vunpack.c.l.b16 %v316
      %v491 = vunpack.c.h.b16 %v316
      %v492 = vunpack.c.l.b16 %v317
      %v493 = vunpack.c.h.b16 %v317
      %v494 = vunpack.c.l.b16 %v318
      %v495 = vunpack.c.h.b16 %v318
      %v496 = vunpack.c.l.b16 %v319
      %v497 = vunpack.c.h.b16 %v319
      %v498 = vunpack.c.l.b16 %v320
      %v499 = vunpack.c.h.b16 %v320
      %v500 = vunpack.c.l.b16 %v321
      %v501 = vunpack.c.h.b16 %v321
      %v502 = vunpack.c.l.b16 %v322
      %v503 = vunpack.c.h.b16 %v322
      %v504 = vunpack.c.l.b16 %v323
      %v505 = vunpack.c.h.b16 %v323
      %v506 = vunpack.c.l.b16 %v324
      %v507 = vunpack.c.h.b16 %v324
      %v508 = vunpack.c.l.b16 %v325
      %v509 = vunpack.c.h.b16 %v325
      %v510 = vunpack.c.l.b16 %v326
      %v511 = vunpack.c.h.b16 %v326
      %v512 = vunpack.c.l.b16 %v327
      %v513 = vunpack.c.h.b16 %v327
      %v514 = vunpack.c.l.b16 %v328
      %v515 = vunpack.c.h.b16 %v328
      %v516 = vunpack.c.l.b16 %v329
      %v517 = vunpack.c.h.b16 %v329
      %v518 = vunpack.c.l.b16 %v330
      %v519 = vunpack.c.h.b16 %v330
      %v520 = vunpack.c.l.b16 %v331
      %v521 = vunpack.c.h.b16 %v331
      %v522 = vunpack.c.l.b16 %v332
      %v523 = vunpack.c.h.b16 %v332
      %v524 = vunpack.c.l.b16 %v333
      %v525 = vunpack.c.h.b16 %v333
      %v526 = vunpack.c.l.b16 %v334
      %v527 = vunpack.c.h.b16 %v334
      %v528 = vunpack.c.l.b16 %v335
      %v529 = vunpack.c.h.b16 %v335
      %v530 = vunpack.c.l.b16 %v336
      %v531 = vunpack.c.h.b16 %v336
      %v532 = vunpack.c.l.b16 %v337
      %v533 = vunpack.c.h.b16 %v337
      %v534 = vunpack.c.l.b16 %v338
      %v535 = vunpack.c.h.b16 %v338
      %v536 = vunpack.c.l.b16 %v339
      %v537 = vunpack.c.h.b16 %v339
      %v538 = vunpack.c.l.b16 %v340
      %v539 = vunpack.c.h.b16 %v340
      %v540 = vunpack.c.l.b16 %v341
      %v541 = vunpack.c.h.b16 %v341
      %v542 = vunpack.c.l.b16 %v342
      %v543 = vunpack.c.h.b16 %v342
      %v544 = vunpack.c.l.b16 %v343
      %v545 = vunpack.c.h.b16 %v343
      %v546 = vunpack.c.l.b16 %v344
      %v547 = vunpack.c.h.b16 %v344
      %v548 = vunpack.c.l.b16 %v345
      %v549 = vunpack.c.h.b16 %v345
      %v550 = vunpack.c.l.b16 %v346
      %v551 = vunpack.c.h.b16 %v346
      %v552 = vunpack.c.l.b16 %v347
      %v553 = vunpack.c.h.b16 %v347
      %v554 = vunpack.c.l.b16 %v348
      %v555 = vunpack.c.h.b16 %v348
      %v556 = vunpack.c.l.b16 %v349
      %v557 = vunpack.c.h.b16 %v349
      %v558 = vunpack.c.l.b16 %v350
      %v559 = vunpack.c.h.b16 %v350
      %v560 = vunpack.c.l.b16 %v351
      %v561 = vunpack.c.h.b16 %v351
      %v562 = vunpack.c.l.b16 %v352
      %v563 = vunpack.c.h.b16 %v352
      %v564 = vunpack.c.l.b16 %v353
      %v565 = vunpack.c.h.b16 %v353
      %v566 = vpack.c.b16 %v440, %v438
      %v567 = vpack.c.b16 %v441, %v439
      %v568 = vpack.c.b16 %v444, %v442
      %v569 = vpack.c.b16 %v445, %v443
      %v570 = vpack.c.b16 %v448, %v446
      %v571 = vpack.c.b16 %v449, %v447
      %v572 = vpack.c.b16 %v452, %v450
      %v573 = vpack.c.b16 %v453, %v451
      %v574 = vpack.c.b16 %v456, %v454
      %v575 = vpack.c.b16 %v457, %v455
      %v576 = vpack.c.b16 %v460, %v458
      %v577 = vpack.c.b16 %v461, %v459
      %v578 = vpack.c.b16 %v464, %v462
      %v579 = vpack.c.b16 %v465, %v463
      %v580 = vpack.c.b16 %v468, %v466
      %v581 = vpack.c.b16 %v469, %v467
      %v582 = vpack.c.b16 %v472, %v470
      %v583 = vpack.c.b16 %v473, %v471
      %v584 = vpack.c.b16 %v476, %v474
      %v585 = vpack.c.b16 %v477, %v475
      %v586 = vpack.c.b16 %v480, %v478
      %v587 = vpack.c.b16 %v481, %v479
      %v588 = vpack.c.b16 %v484, %v482
      %v589 = vpack.c.b16 %v485, %v483
      %v590 = vpack.c.b16 %v488, %v486
      %v591 = vpack.c.b16 %v489, %v487
      %v592 = vpack.c.b16 %v492, %v490
      %v593 = vpack.c.b16 %v493, %v491
      %v594 = vpack.c.b16 %v496, %v494
      %v595 = vpack.c.b16 %v497, %v495
      %v596 = vpack.c.b16 %v500, %v498
      %v597 = vpack.c.b16 %v501, %v499
      %v598 = vpack.c.b16 %v504, %v502
      %v599 = vpack.c.b16 %v505, %v503
      %v600 = vpack.c.b16 %v508, %v506
      %v601 = vpack.c.b16 %v509, %v507
      %v602 = vpack.c.b16 %v512, %v510
      %v603 = vpack.c.b16 %v513, %v511
      %v604 = vpack.c.b16 %v516, %v514
      %v605 = vpack.c.b16 %v517, %v515
      %v606 = vpack.c.b16 %v520, %v518
      %v607 = vpack.c.b16 %v521, %v519
      %v608 = vpack.c.b16 %v524, %v522
      %v609 = vpack.c.b16 %v525, %v523
      %v610 = vpack.c.b16 %v528, %v526
      %v611 = vpack.c.b16 %v529, %v527
      %v612 = vpack.c.b16 %v532, %v530
      %v613 = vpack.c.b16 %v533, %v531
      %v614 = vpack.c.b16 %v536, %v534
      %v615 = vpack.c.b16 %v537, %v535
      %v616 = vpack.c.b16 %v540, %v538
      %v617 = vpack.c.b16 %v541, %v539
      %v618 = vpack.c.b16 %v544, %v542
      %v619 = vpack.c.b16 %v545, %v543
      %v620 = vpack.c.b16 %v548, %v546
      %v621 = vpack.c.b16 %v549, %v547
      %v622 = vpack.c.b16 %v552, %v550
      %v623 = vpack.c.b16 %v553, %v551
      %v624 = vpack.c.b16 %v556, %v554
      %v625 = vpack.c.b16 %v557, %v555
      %v626 = vpack.c.b16 %v560, %v558
      %v627 = vpack.c.b16 %v561, %v559
      %v628 = vpack.c.b16 %v564, %v562
      %v629 = vpack.c.b16 %v565, %v563
      %694 = vmatprep.subr.bf16.mxu0 %v567
      %695 = vmatpush1.bf16.msra.mxu0 %v566
      %696 = vmatprep.subr.bf16.mxu0 %v569
      %697 = vmatpush1.bf16.msra.mxu0 %v568
      %698 = vmatprep.subr.bf16.mxu0 %v571
      %699 = vmatpush1.bf16.msra.mxu0 %v570
      %700 = vmatprep.subr.bf16.mxu0 %v573
      %701 = vmatpush1.bf16.msra.mxu0 %v572
      %702 = vmatprep.subr.bf16.mxu0 %v575
      %703 = vmatpush1.bf16.msra.mxu0 %v574
      %704 = vmatprep.subr.bf16.mxu0 %v577
      %705 = vmatpush1.bf16.msra.mxu0 %v576
      %706 = vmatprep.subr.bf16.mxu0 %v579
      %707 = vmatpush1.bf16.msra.mxu0 %v578
      %708 = vmatprep.subr.bf16.mxu0 %v581
      %709 = vmatpush1.bf16.msra.mxu0 %v580
      %710 = vmatprep.subr.bf16.mxu0 %v583
      %711 = vmatpush1.bf16.msra.mxu0 %v582
      %712 = vmatprep.subr.bf16.mxu0 %v585
      %713 = vmatpush1.bf16.msra.mxu0 %v584
      %714 = vmatprep.subr.bf16.mxu0 %v587
      %715 = vmatpush1.bf16.msra.mxu0 %v586
      %716 = vmatprep.subr.bf16.mxu0 %v589
      %717 = vmatpush1.bf16.msra.mxu0 %v588
      %718 = vmatprep.subr.bf16.mxu0 %v591
      %719 = vmatpush1.bf16.msra.mxu0 %v590
      %720 = vmatprep.subr.bf16.mxu0 %v593
      %721 = vmatpush1.bf16.msra.mxu0 %v592
      %722 = vmatprep.subr.bf16.mxu0 %v595
      %723 = vmatpush1.bf16.msra.mxu0 %v594
      %724 = vmatprep.subr.bf16.mxu0 %v597
      %725 = vmatpush1.bf16.msra.mxu0 %v596
      %726 = vmatprep.mubr.bf16.mxu0 %v367
      %727 = vmatmul.mubr.bf16.gmra.mrb[0].mxu0 %v366
      %v728 = vpop.f32.mrb[0].mxu0
      %v729 = vadd.f32 0.0, %v728
      %v730 = vpop.f32.mrb[0].mxu0
      %v731 = vadd.f32 0.0, %v730
      %v732 = vpop.f32.mrb[0].mxu0
      %v733 = vadd.f32 0.0, %v732
      %v734 = vpop.f32.mrb[0].mxu0
      %v735 = vadd.f32 0.0, %v734
      %736 = vdwg.mxu0
      %737 = vmatprep.subr.bf16.mxu0 %v599
      %738 = vmatpush1.bf16.msra.mxu0 %v598
      %739 = vmatprep.subr.bf16.mxu0 %v601
      %740 = vmatpush1.bf16.msra.mxu0 %v600
      %741 = vmatprep.subr.bf16.mxu0 %v603
      %742 = vmatpush1.bf16.msra.mxu0 %v602
      %743 = vmatprep.subr.bf16.mxu0 %v605
      %744 = vmatpush1.bf16.msra.mxu0 %v604
      %745 = vmatprep.subr.bf16.mxu0 %v607
      %746 = vmatpush1.bf16.msra.mxu0 %v606
      %747 = vmatprep.subr.bf16.mxu0 %v609
      %748 = vmatpush1.bf16.msra.mxu0 %v608
      %749 = vmatprep.subr.bf16.mxu0 %v611
      %750 = vmatpush1.bf16.msra.mxu0 %v610
      %751 = vmatprep.subr.bf16.mxu0 %v613
      %752 = vmatpush1.bf16.msra.mxu0 %v612
      %753 = vmatprep.subr.bf16.mxu0 %v615
      %754 = vmatpush1.bf16.msra.mxu0 %v614
      %755 = vmatprep.subr.bf16.mxu0 %v617
      %756 = vmatpush1.bf16.msra.mxu0 %v616
      %757 = vmatprep.subr.bf16.mxu0 %v619
      %758 = vmatpush1.bf16.msra.mxu0 %v618
      %759 = vmatprep.subr.bf16.mxu0 %v621
      %760 = vmatpush1.bf16.msra.mxu0 %v620
      %761 = vmatprep.subr.bf16.mxu0 %v623
      %762 = vmatpush1.bf16.msra.mxu0 %v622
      %763 = vmatprep.subr.bf16.mxu0 %v625
      %764 = vmatpush1.bf16.msra.mxu0 %v624
      %765 = vmatprep.subr.bf16.mxu0 %v627
      %766 = vmatpush1.bf16.msra.mxu0 %v626
      %767 = vmatprep.subr.bf16.mxu0 %v629
      %768 = vmatpush1.bf16.msra.mxu0 %v628
      %769 = vmatprep.mubr.bf16.mxu0 %v369
      %770 = vmatmul.mubr.bf16.gmra.mrb[0].mxu0 %v368
      %v771 = vpop.f32.mrb[0].mxu0
      %v772 = vadd.f32 %v729, %v771
      %v773 = vpop.f32.mrb[0].mxu0
      %v774 = vadd.f32 %v731, %v773
      %v775 = vpop.f32.mrb[0].mxu0
      %v776 = vadd.f32 %v733, %v775
      %v777 = vpop.f32.mrb[0].mxu0
      %v778 = vadd.f32 %v735, %v777
      %779 = vdwg.mxu0
      %v780 = vld [vmem:[%s2] ss:$2 sm:$0x3]
      %s781 = scalar_lea.vmem %s2, 1
      %v782 = vld [vmem:[%s781] ss:$2 sm:$0x3]
      %v784 = vlaneseq
      %v785 = vshrl.u32 %v784, 7
      %v786 = vsub.s32 0, %v785
      %v787 = vrot.slane %v780, %v786
      %v788 = vlaneseq
      %v789 = vshrl.u32 %v788, 7
      %v790 = vsub.s32 1, %v789
      %v791 = vrot.slane %v780, %v790
      %v794 = vmul.f32 %v772, %v787
      %v795 = vmul.f32 %v774, %v791
      %v796 = vmul.f32 %v776, %v787
      %v797 = vmul.f32 %v778, %v791
      %v799 = vlaneseq
      %v800 = vshrl.u32 %v799, 7
      %v801 = vsub.s32 0, %v800
      %v802 = vrot.slane %v782, %v801
      %v803 = vlaneseq
      %v804 = vshrl.u32 %v803, 7
      %v805 = vsub.s32 1, %v804
      %v806 = vrot.slane %v782, %v805
      %v809 = vadd.f32 %v794, %v802
      %v810 = vadd.f32 %v795, %v806
      %v811 = vadd.f32 %v796, %v802
      %v812 = vadd.f32 %v797, %v806
      %v813 = vmax.f32 %v809, 0.0
      %v814 = vmax.f32 %v810, 0.0
      %v815 = vmax.f32 %v811, 0.0
      %v816 = vmax.f32 %v812, 0.0
      %v817 = vpack.c.bf16 %v815, %v813
      %v818 = vpack.c.bf16 %v816, %v814
      %v819 = vld [vmem:[%s3] sm:$0xff]
      %v820 = vld [vmem:[%s3 + $0x8] sm:$0xff]
      %v821 = vld [vmem:[%s3 + $0x10] sm:$0xff]
      %v822 = vld [vmem:[%s3 + $0x18] sm:$0xff]
      %v823 = vld [vmem:[%s3 + $0x20] sm:$0xff]
      %v824 = vld [vmem:[%s3 + $0x28] sm:$0xff]
      %v825 = vld [vmem:[%s3 + $0x30] sm:$0xff]
      %v826 = vld [vmem:[%s3 + $0x38] sm:$0xff]
      %v827 = vld [vmem:[%s3 + $0x40] sm:$0xff]
      %v828 = vld [vmem:[%s3 + $0x48] sm:$0xff]
      %v829 = vld [vmem:[%s3 + $0x50] sm:$0xff]
      %v830 = vld [vmem:[%s3 + $0x58] sm:$0xff]
      %v831 = vld [vmem:[%s3 + $0x60] sm:$0xff]
      %v832 = vld [vmem:[%s3 + $0x68] sm:$0xff]
      %v833 = vld [vmem:[%s3 + $0x70] sm:$0xff]
      %v834 = vld [vmem:[%s3 + $0x78] sm:$0xff]
      %v835 = vld [vmem:[%s3 + $0x80] sm:$0xff]
      %v836 = vld [vmem:[%s3 + $0x88] sm:$0xff]
      %v837 = vld [vmem:[%s3 + $0x90] sm:$0xff]
      %v838 = vld [vmem:[%s3 + $0x98] sm:$0xff]
      %v839 = vld [vmem:[%s3 + $0xa0] sm:$0xff]
      %v840 = vld [vmem:[%s3 + $0xa8] sm:$0xff]
      %v841 = vld [vmem:[%s3 + $0xb0] sm:$0xff]
      %v842 = vld [vmem:[%s3 + $0xb8] sm:$0xff]
      %v843 = vld [vmem:[%s3 + $0xc0] sm:$0xff]
      %v844 = vld [vmem:[%s3 + $0xc8] sm:$0xff]
      %v845 = vld [vmem:[%s3 + $0xd0] sm:$0xff]
      %v846 = vld [vmem:[%s3 + $0xd8] sm:$0xff]
      %v847 = vld [vmem:[%s3 + $0xe0] sm:$0xff]
      %v848 = vld [vmem:[%s3 + $0xe8] sm:$0xff]
      %v849 = vld [vmem:[%s3 + $0xf0] sm:$0xff]
      %v850 = vld [vmem:[%s3 + $0xf8] sm:$0xff]
      %v851 = vld [vmem:[%s3 + $0x100] sm:$0xff]
      %v852 = vld [vmem:[%s3 + $0x108] sm:$0xff]
      %v853 = vld [vmem:[%s3 + $0x110] sm:$0xff]
      %v854 = vld [vmem:[%s3 + $0x118] sm:$0xff]
      %v855 = vld [vmem:[%s3 + $0x120] sm:$0xff]
      %v856 = vld [vmem:[%s3 + $0x128] sm:$0xff]
      %v857 = vld [vmem:[%s3 + $0x130] sm:$0xff]
      %v858 = vld [vmem:[%s3 + $0x138] sm:$0xff]
      %v859 = vld [vmem:[%s3 + $0x140] sm:$0xff]
      %v860 = vld [vmem:[%s3 + $0x148] sm:$0xff]
      %v861 = vld [vmem:[%s3 + $0x150] sm:$0xff]
      %v862 = vld [vmem:[%s3 + $0x158] sm:$0xff]
      %v863 = vld [vmem:[%s3 + $0x160] sm:$0xff]
      %v864 = vld [vmem:[%s3 + $0x168] sm:$0xff]
      %v865 = vld [vmem:[%s3 + $0x170] sm:$0xff]
      %v866 = vld [vmem:[%s3 + $0x178] sm:$0xff]
      %v867 = vld [vmem:[%s3 + $0x180] sm:$0xff]
      %v868 = vld [vmem:[%s3 + $0x188] sm:$0xff]
      %v869 = vld [vmem:[%s3 + $0x190] sm:$0xff]
      %v870 = vld [vmem:[%s3 + $0x198] sm:$0xff]
      %v871 = vld [vmem:[%s3 + $0x1a0] sm:$0xff]
      %v872 = vld [vmem:[%s3 + $0x1a8] sm:$0xff]
      %v873 = vld [vmem:[%s3 + $0x1b0] sm:$0xff]
      %v874 = vld [vmem:[%s3 + $0x1b8] sm:$0xff]
      %v875 = vld [vmem:[%s3 + $0x1c0] sm:$0xff]
      %v876 = vld [vmem:[%s3 + $0x1c8] sm:$0xff]
      %v877 = vld [vmem:[%s3 + $0x1d0] sm:$0xff]
      %v878 = vld [vmem:[%s3 + $0x1d8] sm:$0xff]
      %v879 = vld [vmem:[%s3 + $0x1e0] sm:$0xff]
      %v880 = vld [vmem:[%s3 + $0x1e8] sm:$0xff]
      %v881 = vld [vmem:[%s3 + $0x1f0] sm:$0xff]
      %v882 = vld [vmem:[%s3 + $0x1f8] sm:$0xff]
      %v883 = vld [vmem:[%s4] sm:$0xf]
      %v885 = vlaneseq
      %v886 = vshrl.u32 %v885, 7
      %v887 = vsub.s32 0, %v886
      %v888 = vrot.slane %v883, %v887
      %v889 = vlaneseq
      %v890 = vshrl.u32 %v889, 7
      %v891 = vsub.s32 1, %v890
      %v892 = vrot.slane %v883, %v891
      %v893 = vlaneseq
      %v894 = vshrl.u32 %v893, 7
      %v895 = vsub.s32 2, %v894
      %v896 = vrot.slane %v883, %v895
      %v897 = vlaneseq
      %v898 = vshrl.u32 %v897, 7
      %v899 = vsub.s32 3, %v898
      %v900 = vrot.slane %v883, %v899
      %v969 = vunpack.c.l.b16 %v819
      %v970 = vunpack.c.h.b16 %v819
      %v971 = vunpack.c.l.b16 %v820
      %v972 = vunpack.c.h.b16 %v820
      %v973 = vunpack.c.l.b16 %v821
      %v974 = vunpack.c.h.b16 %v821
      %v975 = vunpack.c.l.b16 %v822
      %v976 = vunpack.c.h.b16 %v822
      %v977 = vunpack.c.l.b16 %v823
      %v978 = vunpack.c.h.b16 %v823
      %v979 = vunpack.c.l.b16 %v824
      %v980 = vunpack.c.h.b16 %v824
      %v981 = vunpack.c.l.b16 %v825
      %v982 = vunpack.c.h.b16 %v825
      %v983 = vunpack.c.l.b16 %v826
      %v984 = vunpack.c.h.b16 %v826
      %v985 = vunpack.c.l.b16 %v827
      %v986 = vunpack.c.h.b16 %v827
      %v987 = vunpack.c.l.b16 %v828
      %v988 = vunpack.c.h.b16 %v828
      %v989 = vunpack.c.l.b16 %v829
      %v990 = vunpack.c.h.b16 %v829
      %v991 = vunpack.c.l.b16 %v830
      %v992 = vunpack.c.h.b16 %v830
      %v993 = vunpack.c.l.b16 %v831
      %v994 = vunpack.c.h.b16 %v831
      %v995 = vunpack.c.l.b16 %v832
      %v996 = vunpack.c.h.b16 %v832
      %v997 = vunpack.c.l.b16 %v833
      %v998 = vunpack.c.h.b16 %v833
      %v999 = vunpack.c.l.b16 %v834
      %v1000 = vunpack.c.h.b16 %v834
      %v1001 = vunpack.c.l.b16 %v835
      %v1002 = vunpack.c.h.b16 %v835
      %v1003 = vunpack.c.l.b16 %v836
      %v1004 = vunpack.c.h.b16 %v836
      %v1005 = vunpack.c.l.b16 %v837
      %v1006 = vunpack.c.h.b16 %v837
      %v1007 = vunpack.c.l.b16 %v838
      %v1008 = vunpack.c.h.b16 %v838
      %v1009 = vunpack.c.l.b16 %v839
      %v1010 = vunpack.c.h.b16 %v839
      %v1011 = vunpack.c.l.b16 %v840
      %v1012 = vunpack.c.h.b16 %v840
      %v1013 = vunpack.c.l.b16 %v841
      %v1014 = vunpack.c.h.b16 %v841
      %v1015 = vunpack.c.l.b16 %v842
      %v1016 = vunpack.c.h.b16 %v842
      %v1017 = vunpack.c.l.b16 %v843
      %v1018 = vunpack.c.h.b16 %v843
      %v1019 = vunpack.c.l.b16 %v844
      %v1020 = vunpack.c.h.b16 %v844
      %v1021 = vunpack.c.l.b16 %v845
      %v1022 = vunpack.c.h.b16 %v845
      %v1023 = vunpack.c.l.b16 %v846
      %v1024 = vunpack.c.h.b16 %v846
      %v1025 = vunpack.c.l.b16 %v847
      %v1026 = vunpack.c.h.b16 %v847
      %v1027 = vunpack.c.l.b16 %v848
      %v1028 = vunpack.c.h.b16 %v848
      %v1029 = vunpack.c.l.b16 %v849
      %v1030 = vunpack.c.h.b16 %v849
      %v1031 = vunpack.c.l.b16 %v850
      %v1032 = vunpack.c.h.b16 %v850
      %v1033 = vunpack.c.l.b16 %v851
      %v1034 = vunpack.c.h.b16 %v851
      %v1035 = vunpack.c.l.b16 %v852
      %v1036 = vunpack.c.h.b16 %v852
      %v1037 = vunpack.c.l.b16 %v853
      %v1038 = vunpack.c.h.b16 %v853
      %v1039 = vunpack.c.l.b16 %v854
      %v1040 = vunpack.c.h.b16 %v854
      %v1041 = vunpack.c.l.b16 %v855
      %v1042 = vunpack.c.h.b16 %v855
      %v1043 = vunpack.c.l.b16 %v856
      %v1044 = vunpack.c.h.b16 %v856
      %v1045 = vunpack.c.l.b16 %v857
      %v1046 = vunpack.c.h.b16 %v857
      %v1047 = vunpack.c.l.b16 %v858
      %v1048 = vunpack.c.h.b16 %v858
      %v1049 = vunpack.c.l.b16 %v859
      %v1050 = vunpack.c.h.b16 %v859
      %v1051 = vunpack.c.l.b16 %v860
      %v1052 = vunpack.c.h.b16 %v860
      %v1053 = vunpack.c.l.b16 %v861
      %v1054 = vunpack.c.h.b16 %v861
      %v1055 = vunpack.c.l.b16 %v862
      %v1056 = vunpack.c.h.b16 %v862
      %v1057 = vunpack.c.l.b16 %v863
      %v1058 = vunpack.c.h.b16 %v863
      %v1059 = vunpack.c.l.b16 %v864
      %v1060 = vunpack.c.h.b16 %v864
      %v1061 = vunpack.c.l.b16 %v865
      %v1062 = vunpack.c.h.b16 %v865
      %v1063 = vunpack.c.l.b16 %v866
      %v1064 = vunpack.c.h.b16 %v866
      %v1065 = vunpack.c.l.b16 %v867
      %v1066 = vunpack.c.h.b16 %v867
      %v1067 = vunpack.c.l.b16 %v868
      %v1068 = vunpack.c.h.b16 %v868
      %v1069 = vunpack.c.l.b16 %v869
      %v1070 = vunpack.c.h.b16 %v869
      %v1071 = vunpack.c.l.b16 %v870
      %v1072 = vunpack.c.h.b16 %v870
      %v1073 = vunpack.c.l.b16 %v871
      %v1074 = vunpack.c.h.b16 %v871
      %v1075 = vunpack.c.l.b16 %v872
      %v1076 = vunpack.c.h.b16 %v872
      %v1077 = vunpack.c.l.b16 %v873
      %v1078 = vunpack.c.h.b16 %v873
      %v1079 = vunpack.c.l.b16 %v874
      %v1080 = vunpack.c.h.b16 %v874
      %v1081 = vunpack.c.l.b16 %v875
      %v1082 = vunpack.c.h.b16 %v875
      %v1083 = vunpack.c.l.b16 %v876
      %v1084 = vunpack.c.h.b16 %v876
      %v1085 = vunpack.c.l.b16 %v877
      %v1086 = vunpack.c.h.b16 %v877
      %v1087 = vunpack.c.l.b16 %v878
      %v1088 = vunpack.c.h.b16 %v878
      %v1089 = vunpack.c.l.b16 %v879
      %v1090 = vunpack.c.h.b16 %v879
      %v1091 = vunpack.c.l.b16 %v880
      %v1092 = vunpack.c.h.b16 %v880
      %v1093 = vunpack.c.l.b16 %v881
      %v1094 = vunpack.c.h.b16 %v881
      %v1095 = vunpack.c.l.b16 %v882
      %v1096 = vunpack.c.h.b16 %v882
      %v1097 = vpack.c.b16 %v973, %v969
      %v1098 = vpack.c.b16 %v974, %v970
      %v1099 = vpack.c.b16 %v975, %v971
      %v1100 = vpack.c.b16 %v976, %v972
      %v1101 = vpack.c.b16 %v981, %v977
      %v1102 = vpack.c.b16 %v982, %v978
      %v1103 = vpack.c.b16 %v983, %v979
      %v1104 = vpack.c.b16 %v984, %v980
      %v1105 = vpack.c.b16 %v989, %v985
      %v1106 = vpack.c.b16 %v990, %v986
      %v1107 = vpack.c.b16 %v991, %v987
      %v1108 = vpack.c.b16 %v992, %v988
      %v1109 = vpack.c.b16 %v997, %v993
      %v1110 = vpack.c.b16 %v998, %v994
      %v1111 = vpack.c.b16 %v999, %v995
      %v1112 = vpack.c.b16 %v1000, %v996
      %v1113 = vpack.c.b16 %v1005, %v1001
      %v1114 = vpack.c.b16 %v1006, %v1002
      %v1115 = vpack.c.b16 %v1007, %v1003
      %v1116 = vpack.c.b16 %v1008, %v1004
      %v1117 = vpack.c.b16 %v1013, %v1009
      %v1118 = vpack.c.b16 %v1014, %v1010
      %v1119 = vpack.c.b16 %v1015, %v1011
      %v1120 = vpack.c.b16 %v1016, %v1012
      %v1121 = vpack.c.b16 %v1021, %v1017
      %v1122 = vpack.c.b16 %v1022, %v1018
      %v1123 = vpack.c.b16 %v1023, %v1019
      %v1124 = vpack.c.b16 %v1024, %v1020
      %v1125 = vpack.c.b16 %v1029, %v1025
      %v1126 = vpack.c.b16 %v1030, %v1026
      %v1127 = vpack.c.b16 %v1031, %v1027
      %v1128 = vpack.c.b16 %v1032, %v1028
      %v1129 = vpack.c.b16 %v1037, %v1033
      %v1130 = vpack.c.b16 %v1038, %v1034
      %v1131 = vpack.c.b16 %v1039, %v1035
      %v1132 = vpack.c.b16 %v1040, %v1036
      %v1133 = vpack.c.b16 %v1045, %v1041
      %v1134 = vpack.c.b16 %v1046, %v1042
      %v1135 = vpack.c.b16 %v1047, %v1043
      %v1136 = vpack.c.b16 %v1048, %v1044
      %v1137 = vpack.c.b16 %v1053, %v1049
      %v1138 = vpack.c.b16 %v1054, %v1050
      %v1139 = vpack.c.b16 %v1055, %v1051
      %v1140 = vpack.c.b16 %v1056, %v1052
      %v1141 = vpack.c.b16 %v1061, %v1057
      %v1142 = vpack.c.b16 %v1062, %v1058
      %v1143 = vpack.c.b16 %v1063, %v1059
      %v1144 = vpack.c.b16 %v1064, %v1060
      %v1145 = vpack.c.b16 %v1069, %v1065
      %v1146 = vpack.c.b16 %v1070, %v1066
      %v1147 = vpack.c.b16 %v1071, %v1067
      %v1148 = vpack.c.b16 %v1072, %v1068
      %v1149 = vpack.c.b16 %v1077, %v1073
      %v1150 = vpack.c.b16 %v1078, %v1074
      %v1151 = vpack.c.b16 %v1079, %v1075
      %v1152 = vpack.c.b16 %v1080, %v1076
      %v1153 = vpack.c.b16 %v1085, %v1081
      %v1154 = vpack.c.b16 %v1086, %v1082
      %v1155 = vpack.c.b16 %v1087, %v1083
      %v1156 = vpack.c.b16 %v1088, %v1084
      %v1157 = vpack.c.b16 %v1093, %v1089
      %v1158 = vpack.c.b16 %v1094, %v1090
      %v1159 = vpack.c.b16 %v1095, %v1091
      %v1160 = vpack.c.b16 %v1096, %v1092
      %1225 = vmatprep.subr.bf16.mxu0 %v1098
      %1226 = vmatpush1.bf16.msra.mxu0 %v1097
      %1227 = vmatprep.subr.bf16.mxu0 %v1102
      %1228 = vmatpush1.bf16.msra.mxu0 %v1101
      %1229 = vmatprep.subr.bf16.mxu0 %v1106
      %1230 = vmatpush1.bf16.msra.mxu0 %v1105
      %1231 = vmatprep.subr.bf16.mxu0 %v1110
      %1232 = vmatpush1.bf16.msra.mxu0 %v1109
      %1233 = vmatprep.subr.bf16.mxu0 %v1114
      %1234 = vmatpush1.bf16.msra.mxu0 %v1113
      %1235 = vmatprep.subr.bf16.mxu0 %v1118
      %1236 = vmatpush1.bf16.msra.mxu0 %v1117
      %1237 = vmatprep.subr.bf16.mxu0 %v1122
      %1238 = vmatpush1.bf16.msra.mxu0 %v1121
      %1239 = vmatprep.subr.bf16.mxu0 %v1126
      %1240 = vmatpush1.bf16.msra.mxu0 %v1125
      %1241 = vmatprep.subr.bf16.mxu0 %v1130
      %1242 = vmatpush1.bf16.msra.mxu0 %v1129
      %1243 = vmatprep.subr.bf16.mxu0 %v1134
      %1244 = vmatpush1.bf16.msra.mxu0 %v1133
      %1245 = vmatprep.subr.bf16.mxu0 %v1138
      %1246 = vmatpush1.bf16.msra.mxu0 %v1137
      %1247 = vmatprep.subr.bf16.mxu0 %v1142
      %1248 = vmatpush1.bf16.msra.mxu0 %v1141
      %1249 = vmatprep.subr.bf16.mxu0 %v1146
      %1250 = vmatpush1.bf16.msra.mxu0 %v1145
      %1251 = vmatprep.subr.bf16.mxu0 %v1150
      %1252 = vmatpush1.bf16.msra.mxu0 %v1149
      %1253 = vmatprep.subr.bf16.mxu0 %v1154
      %1254 = vmatpush1.bf16.msra.mxu0 %v1153
      %1255 = vmatprep.subr.bf16.mxu0 %v1158
      %1256 = vmatpush1.bf16.msra.mxu0 %v1157
      %1257 = vmatprep.mubr.bf16.mxu0 %v818
      %1258 = vmatmul.mubr.bf16.gmra.mrb[0].mxu0 %v817
      %v1259 = vpop.f32.mrb[0].mxu0
      %v1260 = vadd.f32 %v888, %v1259
      %v1261 = vpop.f32.mrb[0].mxu0
      %v1262 = vadd.f32 %v892, %v1261
      %v1263 = vpop.f32.mrb[0].mxu0
      %v1264 = vadd.f32 %v888, %v1263
      %v1265 = vpop.f32.mrb[0].mxu0
      %v1266 = vadd.f32 %v892, %v1265
      %1267 = vdwg.mxu0
      %1268 = vmatprep.subr.bf16.mxu0 %v1100
      %1269 = vmatpush1.bf16.msra.mxu0 %v1099
      %1270 = vmatprep.subr.bf16.mxu0 %v1104
      %1271 = vmatpush1.bf16.msra.mxu0 %v1103
      %1272 = vmatprep.subr.bf16.mxu0 %v1108
      %1273 = vmatpush1.bf16.msra.mxu0 %v1107
      %1274 = vmatprep.subr.bf16.mxu0 %v1112
      %1275 = vmatpush1.bf16.msra.mxu0 %v1111
      %1276 = vmatprep.subr.bf16.mxu0 %v1116
      %1277 = vmatpush1.bf16.msra.mxu0 %v1115
      %1278 = vmatprep.subr.bf16.mxu0 %v1120
      %1279 = vmatpush1.bf16.msra.mxu0 %v1119
      %1280 = vmatprep.subr.bf16.mxu0 %v1124
      %1281 = vmatpush1.bf16.msra.mxu0 %v1123
      %1282 = vmatprep.subr.bf16.mxu0 %v1128
      %1283 = vmatpush1.bf16.msra.mxu0 %v1127
      %1284 = vmatprep.subr.bf16.mxu0 %v1132
      %1285 = vmatpush1.bf16.msra.mxu0 %v1131
      %1286 = vmatprep.subr.bf16.mxu0 %v1136
      %1287 = vmatpush1.bf16.msra.mxu0 %v1135
      %1288 = vmatprep.subr.bf16.mxu0 %v1140
      %1289 = vmatpush1.bf16.msra.mxu0 %v1139
      %1290 = vmatprep.subr.bf16.mxu0 %v1144
      %1291 = vmatpush1.bf16.msra.mxu0 %v1143
      %1292 = vmatprep.subr.bf16.mxu0 %v1148
      %1293 = vmatpush1.bf16.msra.mxu0 %v1147
      %1294 = vmatprep.subr.bf16.mxu0 %v1152
      %1295 = vmatpush1.bf16.msra.mxu0 %v1151
      %1296 = vmatprep.subr.bf16.mxu0 %v1156
      %1297 = vmatpush1.bf16.msra.mxu0 %v1155
      %1298 = vmatprep.subr.bf16.mxu0 %v1160
      %1299 = vmatpush1.bf16.msra.mxu0 %v1159
      %1300 = vmatprep.mubr.bf16.mxu0 %v818
      %1301 = vmatmul.mubr.bf16.gmra.mrb[0].mxu0 %v817
      %v1302 = vpop.f32.mrb[0].mxu0
      %v1303 = vadd.f32 %v896, %v1302
      %v1304 = vpop.f32.mrb[0].mxu0
      %v1305 = vadd.f32 %v900, %v1304
      %v1306 = vpop.f32.mrb[0].mxu0
      %v1307 = vadd.f32 %v896, %v1306
      %v1308 = vpop.f32.mrb[0].mxu0
      %v1309 = vadd.f32 %v900, %v1308
      %1310 = vdwg.mxu0
      %v1311 = vmax.f32 %v1260, 0.0
      %v1312 = vmax.f32 %v1262, 0.0
      %v1313 = vmax.f32 %v1303, 0.0
      %v1314 = vmax.f32 %v1305, 0.0
      %v1315 = vmax.f32 %v1264, 0.0
      %v1316 = vmax.f32 %v1266, 0.0
      %v1317 = vmax.f32 %v1307, 0.0
      %v1318 = vmax.f32 %v1309, 0.0
      %v1319 = vpack.c.bf16 %v1315, %v1311
      %v1320 = vpack.c.bf16 %v1316, %v1312
      %v1321 = vpack.c.bf16 %v1317, %v1313
      %v1322 = vpack.c.bf16 %v1318, %v1314
      %v1323 = vld [vmem:[%s5] sm:$0xf]
      %v1324 = vld [vmem:[%s5 + $0x4] sm:$0xf]
      %v1325 = vld [vmem:[%s5 + $0x8] sm:$0xf]
      %v1326 = vld [vmem:[%s5 + $0xc] sm:$0xf]
      %v1327 = vld [vmem:[%s5 + $0x10] sm:$0xf]
      %v1328 = vld [vmem:[%s5 + $0x14] sm:$0xf]
      %v1329 = vld [vmem:[%s5 + $0x18] sm:$0xf]
      %v1330 = vld [vmem:[%s5 + $0x1c] sm:$0xf]
      %v1331 = vld [vmem:[%s5 + $0x20] sm:$0xf]
      %v1332 = vld [vmem:[%s5 + $0x24] sm:$0xf]
      %v1333 = vld [vmem:[%s5 + $0x28] sm:$0xf]
      %v1334 = vld [vmem:[%s5 + $0x2c] sm:$0xf]
      %v1335 = vld [vmem:[%s5 + $0x30] sm:$0xf]
      %v1336 = vld [vmem:[%s5 + $0x34] sm:$0xf]
      %v1337 = vld [vmem:[%s5 + $0x38] sm:$0xf]
      %v1338 = vld [vmem:[%s5 + $0x3c] sm:$0xf]
      %v1339 = vld [vmem:[%s5 + $0x40] sm:$0xf]
      %v1340 = vld [vmem:[%s5 + $0x44] sm:$0xf]
      %v1341 = vld [vmem:[%s5 + $0x48] sm:$0xf]
      %v1342 = vld [vmem:[%s5 + $0x4c] sm:$0xf]
      %v1343 = vld [vmem:[%s5 + $0x50] sm:$0xf]
      %v1344 = vld [vmem:[%s5 + $0x54] sm:$0xf]
      %v1345 = vld [vmem:[%s5 + $0x58] sm:$0xf]
      %v1346 = vld [vmem:[%s5 + $0x5c] sm:$0xf]
      %v1347 = vld [vmem:[%s5 + $0x60] sm:$0xf]
      %v1348 = vld [vmem:[%s5 + $0x64] sm:$0xf]
      %v1349 = vld [vmem:[%s5 + $0x68] sm:$0xf]
      %v1350 = vld [vmem:[%s5 + $0x6c] sm:$0xf]
      %v1351 = vld [vmem:[%s5 + $0x70] sm:$0xf]
      %v1352 = vld [vmem:[%s5 + $0x74] sm:$0xf]
      %v1353 = vld [vmem:[%s5 + $0x78] sm:$0xf]
      %v1354 = vld [vmem:[%s5 + $0x7c] sm:$0xf]
      %v1355 = vld [vmem:[%s5 + $0x80] sm:$0xf]
      %v1356 = vld [vmem:[%s5 + $0x84] sm:$0xf]
      %v1357 = vld [vmem:[%s5 + $0x88] sm:$0xf]
      %v1358 = vld [vmem:[%s5 + $0x8c] sm:$0xf]
      %v1359 = vld [vmem:[%s5 + $0x90] sm:$0xf]
      %v1360 = vld [vmem:[%s5 + $0x94] sm:$0xf]
      %v1361 = vld [vmem:[%s5 + $0x98] sm:$0xf]
      %v1362 = vld [vmem:[%s5 + $0x9c] sm:$0xf]
      %v1363 = vld [vmem:[%s5 + $0xa0] sm:$0xf]
      %v1364 = vld [vmem:[%s5 + $0xa4] sm:$0xf]
      %v1365 = vld [vmem:[%s5 + $0xa8] sm:$0xf]
      %v1366 = vld [vmem:[%s5 + $0xac] sm:$0xf]
      %v1367 = vld [vmem:[%s5 + $0xb0] sm:$0xf]
      %v1368 = vld [vmem:[%s5 + $0xb4] sm:$0xf]
      %v1369 = vld [vmem:[%s5 + $0xb8] sm:$0xf]
      %v1370 = vld [vmem:[%s5 + $0xbc] sm:$0xf]
      %v1371 = vld [vmem:[%s5 + $0xc0] sm:$0xf]
      %v1372 = vld [vmem:[%s5 + $0xc4] sm:$0xf]
      %v1373 = vld [vmem:[%s5 + $0xc8] sm:$0xf]
      %v1374 = vld [vmem:[%s5 + $0xcc] sm:$0xf]
      %v1375 = vld [vmem:[%s5 + $0xd0] sm:$0xf]
      %v1376 = vld [vmem:[%s5 + $0xd4] sm:$0xf]
      %v1377 = vld [vmem:[%s5 + $0xd8] sm:$0xf]
      %v1378 = vld [vmem:[%s5 + $0xdc] sm:$0xf]
      %v1379 = vld [vmem:[%s5 + $0xe0] sm:$0xf]
      %v1380 = vld [vmem:[%s5 + $0xe4] sm:$0xf]
      %v1381 = vld [vmem:[%s5 + $0xe8] sm:$0xf]
      %v1382 = vld [vmem:[%s5 + $0xec] sm:$0xf]
      %v1383 = vld [vmem:[%s5 + $0xf0] sm:$0xf]
      %v1384 = vld [vmem:[%s5 + $0xf4] sm:$0xf]
      %v1385 = vld [vmem:[%s5 + $0xf8] sm:$0xf]
      %v1386 = vld [vmem:[%s5 + $0xfc] sm:$0xf]
      %v1387 = vld [vmem:[%s6] sm:$0x1]
      %v1389 = vlaneseq
      %v1390 = vshrl.u32 %v1389, 7
      %v1391 = vsub.s32 0, %v1390
      %v1392 = vrot.slane %v1387, %v1391
      %v1458 = vunpack.c.l.b16 %v1323
      %v1459 = vunpack.c.l.b16 %v1324
      %v1460 = vunpack.c.l.b16 %v1325
      %v1461 = vunpack.c.l.b16 %v1326
      %v1462 = vunpack.c.l.b16 %v1327
      %v1463 = vunpack.c.l.b16 %v1328
      %v1464 = vunpack.c.l.b16 %v1329
      %v1465 = vunpack.c.l.b16 %v1330
      %v1466 = vunpack.c.l.b16 %v1331
      %v1467 = vunpack.c.l.b16 %v1332
      %v1468 = vunpack.c.l.b16 %v1333
      %v1469 = vunpack.c.l.b16 %v1334
      %v1470 = vunpack.c.l.b16 %v1335
      %v1471 = vunpack.c.l.b16 %v1336
      %v1472 = vunpack.c.l.b16 %v1337
      %v1473 = vunpack.c.l.b16 %v1338
      %v1474 = vunpack.c.l.b16 %v1339
      %v1475 = vunpack.c.l.b16 %v1340
      %v1476 = vunpack.c.l.b16 %v1341
      %v1477 = vunpack.c.l.b16 %v1342
      %v1478 = vunpack.c.l.b16 %v1343
      %v1479 = vunpack.c.l.b16 %v1344
      %v1480 = vunpack.c.l.b16 %v1345
      %v1481 = vunpack.c.l.b16 %v1346
      %v1482 = vunpack.c.l.b16 %v1347
      %v1483 = vunpack.c.l.b16 %v1348
      %v1484 = vunpack.c.l.b16 %v1349
      %v1485 = vunpack.c.l.b16 %v1350
      %v1486 = vunpack.c.l.b16 %v1351
      %v1487 = vunpack.c.l.b16 %v1352
      %v1488 = vunpack.c.l.b16 %v1353
      %v1489 = vunpack.c.l.b16 %v1354
      %v1490 = vunpack.c.l.b16 %v1355
      %v1491 = vunpack.c.l.b16 %v1356
      %v1492 = vunpack.c.l.b16 %v1357
      %v1493 = vunpack.c.l.b16 %v1358
      %v1494 = vunpack.c.l.b16 %v1359
      %v1495 = vunpack.c.l.b16 %v1360
      %v1496 = vunpack.c.l.b16 %v1361
      %v1497 = vunpack.c.l.b16 %v1362
      %v1498 = vunpack.c.l.b16 %v1363
      %v1499 = vunpack.c.l.b16 %v1364
      %v1500 = vunpack.c.l.b16 %v1365
      %v1501 = vunpack.c.l.b16 %v1366
      %v1502 = vunpack.c.l.b16 %v1367
      %v1503 = vunpack.c.l.b16 %v1368
      %v1504 = vunpack.c.l.b16 %v1369
      %v1505 = vunpack.c.l.b16 %v1370
      %v1506 = vunpack.c.l.b16 %v1371
      %v1507 = vunpack.c.l.b16 %v1372
      %v1508 = vunpack.c.l.b16 %v1373
      %v1509 = vunpack.c.l.b16 %v1374
      %v1510 = vunpack.c.l.b16 %v1375
      %v1511 = vunpack.c.l.b16 %v1376
      %v1512 = vunpack.c.l.b16 %v1377
      %v1513 = vunpack.c.l.b16 %v1378
      %v1514 = vunpack.c.l.b16 %v1379
      %v1515 = vunpack.c.l.b16 %v1380
      %v1516 = vunpack.c.l.b16 %v1381
      %v1517 = vunpack.c.l.b16 %v1382
      %v1518 = vunpack.c.l.b16 %v1383
      %v1519 = vunpack.c.l.b16 %v1384
      %v1520 = vunpack.c.l.b16 %v1385
      %v1521 = vunpack.c.l.b16 %v1386
      %v1522 = vpack.c.b16 %v1459, %v1458
      %v1523 = vpack.c.b16 %v1461, %v1460
      %v1524 = vpack.c.b16 %v1463, %v1462
      %v1525 = vpack.c.b16 %v1465, %v1464
      %v1526 = vpack.c.b16 %v1467, %v1466
      %v1527 = vpack.c.b16 %v1469, %v1468
      %v1528 = vpack.c.b16 %v1471, %v1470
      %v1529 = vpack.c.b16 %v1473, %v1472
      %v1530 = vpack.c.b16 %v1475, %v1474
      %v1531 = vpack.c.b16 %v1477, %v1476
      %v1532 = vpack.c.b16 %v1479, %v1478
      %v1533 = vpack.c.b16 %v1481, %v1480
      %v1534 = vpack.c.b16 %v1483, %v1482
      %v1535 = vpack.c.b16 %v1485, %v1484
      %v1536 = vpack.c.b16 %v1487, %v1486
      %v1537 = vpack.c.b16 %v1489, %v1488
      %v1538 = vpack.c.b16 %v1491, %v1490
      %v1539 = vpack.c.b16 %v1493, %v1492
      %v1540 = vpack.c.b16 %v1495, %v1494
      %v1541 = vpack.c.b16 %v1497, %v1496
      %v1542 = vpack.c.b16 %v1499, %v1498
      %v1543 = vpack.c.b16 %v1501, %v1500
      %v1544 = vpack.c.b16 %v1503, %v1502
      %v1545 = vpack.c.b16 %v1505, %v1504
      %v1546 = vpack.c.b16 %v1507, %v1506
      %v1547 = vpack.c.b16 %v1509, %v1508
      %v1548 = vpack.c.b16 %v1511, %v1510
      %v1549 = vpack.c.b16 %v1513, %v1512
      %v1550 = vpack.c.b16 %v1515, %v1514
      %v1551 = vpack.c.b16 %v1517, %v1516
      %v1552 = vpack.c.b16 %v1519, %v1518
      %v1553 = vpack.c.b16 %v1521, %v1520
      %1586 = vmatprep.subr.bf16.mxu0 0
      %1587 = vmatpush1.bf16.msra.mxu0 %v1522
      %1588 = vmatprep.subr.bf16.mxu0 0
      %1589 = vmatpush1.bf16.msra.mxu0 %v1523
      %1590 = vmatprep.subr.bf16.mxu0 0
      %1591 = vmatpush1.bf16.msra.mxu0 %v1524
      %1592 = vmatprep.subr.bf16.mxu0 0
      %1593 = vmatpush1.bf16.msra.mxu0 %v1525
      %1594 = vmatprep.subr.bf16.mxu0 0
      %1595 = vmatpush1.bf16.msra.mxu0 %v1526
      %1596 = vmatprep.subr.bf16.mxu0 0
      %1597 = vmatpush1.bf16.msra.mxu0 %v1527
      %1598 = vmatprep.subr.bf16.mxu0 0
      %1599 = vmatpush1.bf16.msra.mxu0 %v1528
      %1600 = vmatprep.subr.bf16.mxu0 0
      %1601 = vmatpush1.bf16.msra.mxu0 %v1529
      %1602 = vmatprep.subr.bf16.mxu0 0
      %1603 = vmatpush1.bf16.msra.mxu0 %v1530
      %1604 = vmatprep.subr.bf16.mxu0 0
      %1605 = vmatpush1.bf16.msra.mxu0 %v1531
      %1606 = vmatprep.subr.bf16.mxu0 0
      %1607 = vmatpush1.bf16.msra.mxu0 %v1532
      %1608 = vmatprep.subr.bf16.mxu0 0
      %1609 = vmatpush1.bf16.msra.mxu0 %v1533
      %1610 = vmatprep.subr.bf16.mxu0 0
      %1611 = vmatpush1.bf16.msra.mxu0 %v1534
      %1612 = vmatprep.subr.bf16.mxu0 0
      %1613 = vmatpush1.bf16.msra.mxu0 %v1535
      %1614 = vmatprep.subr.bf16.mxu0 0
      %1615 = vmatpush1.bf16.msra.mxu0 %v1536
      %1616 = vmatprep.subr.bf16.mxu0 0
      %1617 = vmatpush1.bf16.msra.mxu0 %v1537
      %1618 = vmatprep.mubr.bf16.mxu0 %v1320
      %1619 = vmatmul.mubr.bf16.gmra.mrb[0].mxu0 %v1319
      %v1620 = vpop.f32.mrb[0].mxu0
      %v1621 = vadd.f32 %v1392, %v1620
      %v1622 = vpop.f32.mrb[0].mxu0
      %v1623 = vpop.f32.mrb[0].mxu0
      %v1624 = vadd.f32 %v1392, %v1623
      %v1625 = vpop.f32.mrb[0].mxu0
      %1626 = vdwg.mxu0
      %1627 = vmatprep.subr.bf16.mxu0 0
      %1628 = vmatpush1.bf16.msra.mxu0 %v1538
      %1629 = vmatprep.subr.bf16.mxu0 0
      %1630 = vmatpush1.bf16.msra.mxu0 %v1539
      %1631 = vmatprep.subr.bf16.mxu0 0
      %1632 = vmatpush1.bf16.msra.mxu0 %v1540
      %1633 = vmatprep.subr.bf16.mxu0 0
      %1634 = vmatpush1.bf16.msra.mxu0 %v1541
      %1635 = vmatprep.subr.bf16.mxu0 0
      %1636 = vmatpush1.bf16.msra.mxu0 %v1542
      %1637 = vmatprep.subr.bf16.mxu0 0
      %1638 = vmatpush1.bf16.msra.mxu0 %v1543
      %1639 = vmatprep.subr.bf16.mxu0 0
      %1640 = vmatpush1.bf16.msra.mxu0 %v1544
      %1641 = vmatprep.subr.bf16.mxu0 0
      %1642 = vmatpush1.bf16.msra.mxu0 %v1545
      %1643 = vmatprep.subr.bf16.mxu0 0
      %1644 = vmatpush1.bf16.msra.mxu0 %v1546
      %1645 = vmatprep.subr.bf16.mxu0 0
      %1646 = vmatpush1.bf16.msra.mxu0 %v1547
      %1647 = vmatprep.subr.bf16.mxu0 0
      %1648 = vmatpush1.bf16.msra.mxu0 %v1548
      %1649 = vmatprep.subr.bf16.mxu0 0
      %1650 = vmatpush1.bf16.msra.mxu0 %v1549
      %1651 = vmatprep.subr.bf16.mxu0 0
      %1652 = vmatpush1.bf16.msra.mxu0 %v1550
      %1653 = vmatprep.subr.bf16.mxu0 0
      %1654 = vmatpush1.bf16.msra.mxu0 %v1551
      %1655 = vmatprep.subr.bf16.mxu0 0
      %1656 = vmatpush1.bf16.msra.mxu0 %v1552
      %1657 = vmatprep.subr.bf16.mxu0 0
      %1658 = vmatpush1.bf16.msra.mxu0 %v1553
      %1659 = vmatprep.mubr.bf16.mxu0 %v1322
      %1660 = vmatmul.mubr.bf16.gmra.mrb[0].mxu0 %v1321
      %v1661 = vpop.f32.mrb[0].mxu0
      %v1662 = vadd.f32 %v1621, %v1661
      %v1663 = vpop.f32.mrb[0].mxu0
      %v1664 = vpop.f32.mrb[0].mxu0
      %v1665 = vadd.f32 %v1624, %v1664
      %v1666 = vpop.f32.mrb[0].mxu0
      %1667 = vdwg.mxu0
      %v1668 = vlaneseq
      %v1669 = vand.u32 %v1668, 127
      %vm1670 = vcmp.ge.s32.totalorder %v1669, 1
      %vm1671 = vcmp.lt.s32.totalorder %v1669, 18
      %vm1672 = vmand %vm1670, %vm1671
      %v1673 = vsel %vm1672, %v1662, -1e+30
      %v1674 = vsel %vm1672, %v1665, -1e+30
      %1675 = vmax.xlane.f32.xlu0 %v1673
      %v1676 = vpop.xlane.xlu0 %1675
      %1677 = vmax.xlane.f32.xlu0 %v1674
      %v1678 = vpop.xlane.xlu0 %1677
      %v1679 = vsub.f32 %v1673, %v1676
      %v1680 = vsub.f32 %v1674, %v1678
      %v1681 = vmul.f32 %v1679, 1.442695
      %v1682 = vpow.pop %v1681
      %v1683 = vmul.f32 %v1680, 1.442695
      %v1684 = vpow.pop %v1683
      %1685 = vadd.xlane.f32.xlu0 %v1682
      %v1686 = vpop.xlane.xlu0 %1685
      %1687 = vadd.xlane.f32.xlu0 %v1684
      %v1688 = vpop.xlane.xlu0 %1687
      %v1689 = vrcp.pop %v1686
      %v1690 = vrcp.pop %v1688
      %v1691 = vmul.f32 %v1682, %v1689
      %v1692 = vmul.f32 %v1684, %v1690
      %vm1693 = vcmp.eq.s32.totalorder %v1669, 0
      %v1694 = vtanh.pop %v1662
      %v1695 = vtanh.pop %v1665
      %v1696 = vsel %vm1693, %v1694, %v1691
      %v1697 = vsel %vm1693, %v1695, %v1692
      %1698 = vst [vmem:[%s283] sm:$0xff] %v1696
      %1699 = vst [vmem:[%s283 + $0x8] sm:$0xff] %v1697
      %s1700 = smul.u32 2, %s18
      %p1701 = scmp.lt.s32.totalorder %s1700, 5
      %s1702 = scalar_select %p1701, %s1700, 5
      %s1703 = smul.addr %s1702, 8
      %s1704 = scalar_lea.vmem %s7, %s1703
      // Predicated region
      $region49: #{out_block_forward.3} parent=47 // pred_check
        %p1705 = pneg %p188
      $region50: #{out_block_forward.3} parent=47 // pred_check_branch
        %1707 = sbr.rel (%p1705) target = $region52
      $region51: #{out_block_forward.3} parent=47 // pred_region
        %s1708 = smul.u32 2, %s18
      $region52: #{out_block_forward.3} parent=47 // pred_fallthru
        _
    $region48: #{out_block_forward.3} parent=5 // pred_fallthru
      _
    %p1709 = scmp.le.s32.totalorder 2, %s13
    // Predicated region
    $region53: #{out_block_forward.3} parent=5 // pred_check
      %p1710 = pneg %p1709
    $region54: #{out_block_forward.3} parent=5 // pred_check_branch
      %1712 = sbr.rel (%p1710) target = $region56
    $region55: #{out_block_forward.3} parent=5 // pred_region
      %s1713 = ssub.s32 %s13, 2
      // Predicated region
      $region57: #{out_block_forward.3} parent=55 // pred_check
        %p1714 = pneg %p194
      $region58: #{out_block_forward.3} parent=55 // pred_check_branch
        %1716 = sbr.rel (%p1714) target = $region60
      $region59: #{out_block_forward.3} parent=55 // pred_region
        %s1717 = smul.u32 2, %s19
        %p1718 = scmp.lt.s32.totalorder %s1717, 5
        %s1719 = scalar_select %p1718, %s1717, 5
        %s1720 = smul.addr %s1719, 8
        %s1721 = scalar_lea.vmem %s7, %s1720
      $region60: #{out_block_forward.3} parent=55 // pred_fallthru
        _
    $region56: #{out_block_forward.3} parent=5 // pred_fallthru
      _
  $region6: #{out_block_forward.3} parent=0 // loop_footer
    %s17 = sadd.s32 1, %s13
  $region7: #{out_block_forward.3} parent=0 // loop_footer_branch
    %12 = sbr.rel target = $region3
  $region8: #{out_block_forward.3} parent=0 // loop_exit
    _

</llo_original>
